<compile_context>
chip_gen: v5e
topology: v5e:2x2
jax: 0.10.0
libtpu: 0.0.40
codegen_flags: <defaults>
</compile_context>

<pallas_src>
import jax
import jax.numpy as jnp
from jax.experimental import pallas as pl
from jax.experimental.pallas import tpu as pltpu

NUM_BLOCKS = 6
NUM_FEATURE = 32  # "num_feature" of the attention estimator (96 in the module; small here)


def cheby_kernel(x_ref, w1xall_ref, b1all_ref, w1yk_ref, w2_ref, b2_ref,
                 out_ref, hx_ref, yk_ref):
    # x_ref:      (C, TN)        tile: channels on sublanes, pixels on lanes
    # w1xall_ref: (NB*F, C)      stacked x-part of W1 (block 0 folded: w1x+w1y)
    # b1all_ref:  (NB*F, 1)      stacked bias (block 0 absorbs the xk*ones part)
    # w1yk_ref:   (NB, F, 2C)    per-block [W1y^T | W1xk^T]  (block 0 unused)
    # w2_ref:     (NB, C, F)     per-block second-layer weights (transposed)
    # b2_ref:     (NB, C, 1)
    # hx_ref:     VMEM (NB*F, TN) scratch: hoisted x-contribution + bias
    # yk_ref:     VMEM (2C, TN)   scratch: staging buffer [y ; img1]
    x = x_ref[...]                              # (C, TN), f32
    nb, C, F = w2_ref.shape

    # ---- hoisted: x-contribution + bias of every block's first MLP layer ----
    hx_ref[...] = (jnp.dot(w1xall_ref[...], x, preferred_element_type=jnp.float32)
                   + b1all_ref[...])

    # ---- block 0 (abp1), host-folded: y == x and xk == T_0 == ones ----
    h = jnp.maximum(hx_ref[pl.ds(0, F), :], 0.0)
    a = jax.nn.sigmoid(
        jnp.dot(w2_ref[0], h, preferred_element_type=jnp.float32) + b2_ref[0])
    y = a + x                                   # a * T_0 + x  (T_0 == 1)
    img1 = x                                    # T_1
    img2 = 2.0 * x * x - 1.0                    # T_2

    # ---- blocks 1 .. nb-1 (abpList), fully unrolled ----
    for k in range(1, nb):
        # Static-offset sublane stores into the (2C, TN) staging buffer; the
        # single fused dot below replaces two separate (F,C)@(C,TN) matmuls
        # and one (F,TN) elementwise add per block.
        yk_ref[pl.ds(0, C), :] = y
        yk_ref[pl.ds(C, C), :] = img1
        h = (hx_ref[pl.ds(k * F, F), :]
             + jnp.dot(w1yk_ref[k], yk_ref[...], preferred_element_type=jnp.float32))
        h = jnp.maximum(h, 0.0)
        a = jax.nn.sigmoid(
            jnp.dot(w2_ref[k], h, preferred_element_type=jnp.float32) + b2_ref[k])
        y = a * img1 + y
        if k < nb - 2:
            img1, img2 = img2, 2.0 * x * img2 - img1
        elif k == nb - 2:
            img1 = img2
        # k == nb - 1: y is the final output.

    out_ref[...] = y.astype(out_ref.dtype)


def cheby_all_3dab(x_nchw, w1, b1, w2, b2, *, tn=None):
    """ChebyAll3DAB.fast_forward: (N, C, H, W) -> (N, C, H, W)."""
    N, C, H, W = x_nchw.shape
    HW = H * W
    nb, _, _, F = w1.shape

    # Tile size: lane-dense.  VMEM budget per tile ~ (nb*F + ~4*C + live
    # intermediates) * tn * 4B; tn = 8192 keeps the total under ~10 MiB —
    # safe under the 16 MiB (v5e) / 32 MiB (v6e/v7x) default scoped limits
    # while keeping per-grid-step overhead (~0.35 us) negligible.
    if tn is None:
        tn = min(8192, pl.cdiv(HW, 128) * 128)
    tn = max(128, (tn // 128) * 128)
    hw_pad = pl.cdiv(HW, tn) * tn

    # Free reshape NCHW -> (N, C, H*W); pad the pixel axis to a multiple of tn
    # (padded pixels are computed on but sliced away — no tail assert needed).
    x3 = x_nchw.reshape(N, C, HW).astype(jnp.float32)
    if hw_pad != HW:
        x3 = jnp.pad(x3, ((0, 0), (0, 0), (0, hw_pad - HW)))

    # Host-side weight prep (once): transpose for (C, TN) blocks, fold block 0
    # (y == x, xk == ones), stack the x-parts of all blocks into one matmul,
    # and pack [W1y | W1xk] side-by-side for the fused per-block dot.
    w1x_s = jnp.transpose(w1[:, 0], (0, 2, 1))                    # (nb, F, C)
    w1y_s = jnp.transpose(w1[:, 1], (0, 2, 1))                    # (nb, F, C)
    w1k_s = jnp.transpose(w1[:, 2], (0, 2, 1))                    # (nb, F, C)
    b1_s = jnp.transpose(b1, (0, 2, 1))                           # (nb, F, 1)
    w2_s = jnp.transpose(w2, (0, 2, 1))                           # (nb, C, F)
    b2_s = jnp.transpose(b2, (0, 2, 1))                           # (nb, C, 1)

    w1xall = w1x_s.at[0].add(w1y_s[0]).reshape(nb * F, C)         # (nb*F, C)
    b1all = b1_s.at[0].add(
        jnp.sum(w1k_s[0], axis=1, keepdims=True)).reshape(nb * F, 1)  # (nb*F, 1)
    w1yk = jnp.concatenate([w1y_s, w1k_s], axis=2)                # (nb, F, 2C)

    def rep(*shape):  # replicated (resident) weight: constant block index
        return pl.BlockSpec(shape, lambda n, j: (0,) * len(shape))

    grid_spec = pltpu.PrefetchScalarGridSpec(
        num_scalar_prefetch=0,
        grid=(N, hw_pad // tn),
        in_specs=[
            pl.BlockSpec((None, C, tn), lambda n, j: (n, 0, j)),   # x tile (C, tn)
            rep(nb * F, C), rep(nb * F, 1),                        # stacked W1x / b1
            rep(nb, F, 2 * C),                                     # fused [W1y | W1xk]
            rep(nb, C, F), rep(nb, C, 1),                          # W2 / b2
        ],
        out_specs=pl.BlockSpec((None, C, tn), lambda n, j: (n, 0, j)),
        scratch_shapes=[
            pltpu.VMEM((nb * F, tn), jnp.float32),                 # hoisted hx_all
            pltpu.VMEM((2 * C, tn), jnp.float32),                  # [y ; img1] staging
        ],
    )

    out3 = pl.pallas_call(
        cheby_kernel,
        out_shape=jax.ShapeDtypeStruct((N, C, hw_pad), jnp.float32),
        grid_spec=grid_spec,
        compiler_params=pltpu.CompilerParams(
            dimension_semantics=("parallel", "parallel")),
    )(x3, w1xall, b1all, w1yk, w2_s, b2_s)

    if hw_pad != HW:
        out3 = out3[:, :, :HW]
    return out3.reshape(N, C, H, W)


# ----------------------------- pure-JAX reference -----------------------------

def _est_a_ref(xx, yy, xk, w1x, w1y, w1k, b1, w2, b2):
    """Stand-in TripleAttention gate (row layout): per-pixel MLP + sigmoid."""
    h = jnp.dot(xx, w1x) + jnp.dot(yy, w1y) + jnp.dot(xk, w1k) + b1
    h = jnp.maximum(h, 0.0)
    return jax.nn.sigmoid(jnp.dot(h, w2) + b2)


def cheby_all_3dab_reference(x_nchw, w1, b1, w2, b2):
    """Pure-JAX reference of the same fast_forward math (unfused, row layout)."""
    N, C, H, W = x_nchw.shape
    x = jnp.transpose(x_nchw, (0, 2, 3, 1)).reshape(N * H * W, C).astype(jnp.float32)
    img1 = jnp.ones_like(x)
    img2 = x
    y = x
    out = x
    nb = w1.shape[0]
    for k in range(nb):
        yy = x if k == 0 else y
        a = _est_a_ref(x, yy, img1, w1[k, 0], w1[k, 1], w1[k, 2], b1[k], w2[k], b2[k])
        if k == 0:
            y = a * img1 + x
            img1, img2 = img2, 2.0 * x * img2 - img1
        elif k == nb - 1:
            out = a * img1 + y
        elif k == nb - 2:
            y = a * img1 + y
            img1 = img2
        else:
            y = a * img1 + y
            img1, img2 = img2, 2.0 * x * img2 - img1
    return out.reshape(N, H, W, C).transpose(0, 3, 1, 2)


def make_params(key, num_blocks=NUM_BLOCKS, channels=4, feature=NUM_FEATURE):
    k1, k2, k3, k4 = jax.random.split(key, 4)
    w1 = 0.1 * jax.random.normal(k1, (num_blocks, 3, channels, feature), jnp.float32)
    b1 = 0.1 * jax.random.normal(k2, (num_blocks, 1, feature), jnp.float32)
    w2 = 0.1 * jax.random.normal(k3, (num_blocks, feature, channels), jnp.float32)
    b2 = 0.1 * jax.random.normal(k4, (num_blocks, 1, channels), jnp.float32)
    return w1, b1, w2, b2


if __name__ == "__main__":
    key = jax.random.PRNGKey(0)
    kx, kp = jax.random.split(key)

    N, C, H, W = 2, 4, 16, 16
    # Chebyshev domain is [-1, 1]; use bounded inputs (like normalized images).
    x = jax.random.uniform(kx, (N, C, H, W), jnp.float32, minval=-1.0, maxval=1.0)
    w1, b1, w2, b2 = make_params(kp, NUM_BLOCKS, C, NUM_FEATURE)

    out = jax.block_until_ready(cheby_all_3dab(x, w1, b1, w2, b2))
    ref = cheby_all_3dab_reference(x, w1, b1, w2, b2)

    assert out.shape == (N, C, H, W)
    # Tolerance covers summation-order / MXU-pass differences between the
    # hoisted+fused kernel matmuls and the XLA reference dots.
    assert jnp.allclose(out, ref, atol=1e-3, rtol=1e-3), \
        "Pallas kernel mismatch vs JAX reference"

    print("KERNEL_OK")
</pallas_src>

<mosaic_0001>
module attributes {stable_mosaic.version = 11 : i64} {
  func.func @cheby_kernel(%arg0: i32, %arg1: i32, %arg2: memref<1x4x256xf32, #tpu.memory_space<vmem>>, %arg3: memref<192x4xf32, #tpu.memory_space<vmem>>, %arg4: memref<192x1xf32, #tpu.memory_space<vmem>>, %arg5: memref<6x32x8xf32, #tpu.memory_space<vmem>>, %arg6: memref<6x4x32xf32, #tpu.memory_space<vmem>>, %arg7: memref<6x4x1xf32, #tpu.memory_space<vmem>>, %arg8: memref<1x4x256xf32, #tpu.memory_space<vmem>>, %arg9: memref<192x256xf32, #tpu.memory_space<vmem>>, %arg10: memref<8x256xf32, #tpu.memory_space<vmem>>) attributes {dimension_semantics = [#tpu.dimension_semantics<parallel>, #tpu.dimension_semantics<parallel>], iteration_bounds = array<i64: 2, 1>, scalar_prefetch = 0 : i64, scratch_operands = 2 : i64, tpu.core_type = #tpu.core_type<tc>, window_params = [{transform_indices = @transform_0, window_bounds = array<i64: 1, 4, 256>}, {pipeline_mode = #tpu.pipeline_mode<synchronous>, transform_indices = @transform_1, window_bounds = array<i64: 192, 4>}, {pipeline_mode = #tpu.pipeline_mode<synchronous>, transform_indices = @transform_2, window_bounds = array<i64: 192, 1>}, {pipeline_mode = #tpu.pipeline_mode<synchronous>, transform_indices = @transform_3, window_bounds = array<i64: 6, 32, 8>}, {pipeline_mode = #tpu.pipeline_mode<synchronous>, transform_indices = @transform_4, window_bounds = array<i64: 6, 4, 32>}, {pipeline_mode = #tpu.pipeline_mode<synchronous>, transform_indices = @transform_5, window_bounds = array<i64: 6, 4, 1>}, {transform_indices = @transform_6, window_bounds = array<i64: 1, 4, 256>}]} {
    %c0 = arith.constant 0 : index
    %c0_0 = arith.constant 0 : index
    %c0_1 = arith.constant 0 : index
    %0 = vector.load %arg2[%c0, %c0_0, %c0_1] : memref<1x4x256xf32, #tpu.memory_space<vmem>>, vector<1x4x256xf32>
    %1 = vector.shape_cast %0 : vector<1x4x256xf32> to vector<4x256xf32>
    %c0_2 = arith.constant 0 : index
    %c0_3 = arith.constant 0 : index
    %2 = vector.load %arg3[%c0_2, %c0_3] : memref<192x4xf32, #tpu.memory_space<vmem>>, vector<192x4xf32>
    %cst = arith.constant dense<0.000000e+00> : vector<192x256xf32>
    %3 = tpu.matmul %2, %1, %cst {dimension_numbers = #tpu.dot_dimension_numbers<[1], [0], [0], [1], [0, 0, 1, 1], [], []>} : vector<192x4xf32>, vector<4x256xf32>, vector<192x256xf32> -> vector<192x256xf32>
    %c0_4 = arith.constant 0 : index
    %c0_5 = arith.constant 0 : index
    %4 = vector.load %arg4[%c0_4, %c0_5] : memref<192x1xf32, #tpu.memory_space<vmem>>, vector<192x1xf32>
    %5 = vector.broadcast %4 : vector<192x1xf32> to vector<192x256xf32>
    %6 = arith.addf %3, %5 : vector<192x256xf32>
    %c0_6 = arith.constant 0 : index
    %c0_7 = arith.constant 0 : index
    %7 = vector.load %arg9[%c0_6, %c0_7] : memref<192x256xf32, #tpu.memory_space<vmem>>, vector<192x256xf32>
    tpu.vector_store %arg9[%c0_6, %c0_7], %6 {strides = array<i32>} : memref<192x256xf32, #tpu.memory_space<vmem>>, vector<192x256xf32>,
    %c0_8 = arith.constant 0 : index
    %c0_9 = arith.constant 0 : index
    %8 = vector.load %arg9[%c0_8, %c0_9] : memref<192x256xf32, #tpu.memory_space<vmem>>, vector<32x256xf32>
    %cst_10 = arith.constant 0.000000e+00 : f32
    %9 = vector.broadcast %cst_10 : f32 to vector<32x256xf32>
    %10 = arith.maximumf %8, %9 : vector<32x256xf32>
    %c0_11 = arith.constant 0 : index
    %c0_12 = arith.constant 0 : index
    %c0_13 = arith.constant 0 : index
    %11 = vector.load %arg6[%c0_11, %c0_12, %c0_13] : memref<6x4x32xf32, #tpu.memory_space<vmem>>, vector<1x4x32xf32>
    %12 = vector.shape_cast %11 : vector<1x4x32xf32> to vector<4x32xf32>
    %cst_14 = arith.constant dense<0.000000e+00> : vector<4x256xf32>
    %13 = tpu.matmul %12, %10, %cst_14 {dimension_numbers = #tpu.dot_dimension_numbers<[1], [0], [0], [1], [0, 0, 1, 1], [], []>} : vector<4x32xf32>, vector<32x256xf32>, vector<4x256xf32> -> vector<4x256xf32>
    %c0_15 = arith.constant 0 : index
    %c0_16 = arith.constant 0 : index
    %c0_17 = arith.constant 0 : index
    %14 = vector.load %arg7[%c0_15, %c0_16, %c0_17] : memref<6x4x1xf32, #tpu.memory_space<vmem>>, vector<1x4x1xf32>
    %15 = vector.shape_cast %14 : vector<1x4x1xf32> to vector<4x1xf32>
    %16 = vector.broadcast %15 : vector<4x1xf32> to vector<4x256xf32>
    %17 = arith.addf %13, %16 : vector<4x256xf32>
    %18 = arith.negf %17 : vector<4x256xf32>
    %19 = math.exp %18 : vector<4x256xf32>
    %cst_18 = arith.constant 1.000000e+00 : f32
    %20 = vector.broadcast %cst_18 : f32 to vector<4x256xf32>
    %21 = arith.addf %20, %19 : vector<4x256xf32>
    %22 = arith.divf %20, %21 : vector<4x256xf32>
    %23 = arith.addf %22, %1 : vector<4x256xf32>
    %cst_19 = arith.constant 2.000000e+00 : f32
    %24 = vector.broadcast %cst_19 : f32 to vector<4x256xf32>
    %25 = arith.mulf %24, %1 : vector<4x256xf32>
    %26 = arith.mulf %25, %1 : vector<4x256xf32>
    %cst_20 = arith.constant 1.000000e+00 : f32
    %27 = vector.broadcast %cst_20 : f32 to vector<4x256xf32>
    %28 = arith.subf %26, %27 : vector<4x256xf32>
    %c0_21 = arith.constant 0 : index
    %c0_22 = arith.constant 0 : index
    %29 = vector.load %arg10[%c0_21, %c0_22] : memref<8x256xf32, #tpu.memory_space<vmem>>, vector<4x256xf32>
    tpu.vector_store %arg10[%c0_21, %c0_22], %23 {strides = array<i32>} : memref<8x256xf32, #tpu.memory_space<vmem>>, vector<4x256xf32>,
    %c4 = arith.constant 4 : index
    %c0_23 = arith.constant 0 : index
    %30 = vector.load %arg10[%c4, %c0_23] : memref<8x256xf32, #tpu.memory_space<vmem>>, vector<4x256xf32>
    tpu.vector_store %arg10[%c4, %c0_23], %1 {strides = array<i32>} : memref<8x256xf32, #tpu.memory_space<vmem>>, vector<4x256xf32>,
    %c32 = arith.constant 32 : index
    %c0_24 = arith.constant 0 : index
    %31 = vector.load %arg9[%c32, %c0_24] : memref<192x256xf32, #tpu.memory_space<vmem>>, vector<32x256xf32>
    %c1 = arith.constant 1 : index
    %c0_25 = arith.constant 0 : index
    %c0_26 = arith.constant 0 : index
    %32 = vector.load %arg5[%c1, %c0_25, %c0_26] : memref<6x32x8xf32, #tpu.memory_space<vmem>>, vector<1x32x8xf32>
    %33 = vector.shape_cast %32 : vector<1x32x8xf32> to vector<32x8xf32>
    %c0_27 = arith.constant 0 : index
    %c0_28 = arith.constant 0 : index
    %34 = vector.load %arg10[%c0_27, %c0_28] : memref<8x256xf32, #tpu.memory_space<vmem>>, vector<8x256xf32>
    %cst_29 = arith.constant dense<0.000000e+00> : vector<32x256xf32>
    %35 = tpu.matmul %33, %34, %cst_29 {dimension_numbers = #tpu.dot_dimension_numbers<[1], [0], [0], [1], [0, 0, 1, 1], [], []>} : vector<32x8xf32>, vector<8x256xf32>, vector<32x256xf32> -> vector<32x256xf32>
    %36 = arith.addf %31, %35 : vector<32x256xf32>
    %cst_30 = arith.constant 0.000000e+00 : f32
    %37 = vector.broadcast %cst_30 : f32 to vector<32x256xf32>
    %38 = arith.maximumf %36, %37 : vector<32x256xf32>
    %c1_31 = arith.constant 1 : index
    %c0_32 = arith.constant 0 : index
    %c0_33 = arith.constant 0 : index
    %39 = vector.load %arg6[%c1_31, %c0_32, %c0_33] : memref<6x4x32xf32, #tpu.memory_space<vmem>>, vector<1x4x32xf32>
    %40 = vector.shape_cast %39 : vector<1x4x32xf32> to vector<4x32xf32>
    %cst_34 = arith.constant dense<0.000000e+00> : vector<4x256xf32>
    %41 = tpu.matmul %40, %38, %cst_34 {dimension_numbers = #tpu.dot_dimension_numbers<[1], [0], [0], [1], [0, 0, 1, 1], [], []>} : vector<4x32xf32>, vector<32x256xf32>, vector<4x256xf32> -> vector<4x256xf32>
    %c1_35 = arith.constant 1 : index
    %c0_36 = arith.constant 0 : index
    %c0_37 = arith.constant 0 : index
    %42 = vector.load %arg7[%c1_35, %c0_36, %c0_37] : memref<6x4x1xf32, #tpu.memory_space<vmem>>, vector<1x4x1xf32>
    %43 = vector.shape_cast %42 : vector<1x4x1xf32> to vector<4x1xf32>
    %44 = vector.broadcast %43 : vector<4x1xf32> to vector<4x256xf32>
    %45 = arith.addf %41, %44 : vector<4x256xf32>
    %46 = arith.negf %45 : vector<4x256xf32>
    %47 = math.exp %46 : vector<4x256xf32>
    %cst_38 = arith.constant 1.000000e+00 : f32
    %48 = vector.broadcast %cst_38 : f32 to vector<4x256xf32>
    %49 = arith.addf %48, %47 : vector<4x256xf32>
    %50 = arith.divf %48, %49 : vector<4x256xf32>
    %51 = arith.mulf %50, %1 : vector<4x256xf32>
    %52 = arith.addf %51, %23 : vector<4x256xf32>
    %cst_39 = arith.constant 2.000000e+00 : f32
    %53 = vector.broadcast %cst_39 : f32 to vector<4x256xf32>
    %54 = arith.mulf %53, %1 : vector<4x256xf32>
    %55 = arith.mulf %54, %28 : vector<4x256xf32>
    %56 = arith.subf %55, %1 : vector<4x256xf32>
    %c0_40 = arith.constant 0 : index
    %c0_41 = arith.constant 0 : index
    %57 = vector.load %arg10[%c0_40, %c0_41] : memref<8x256xf32, #tpu.memory_space<vmem>>, vector<4x256xf32>
    tpu.vector_store %arg10[%c0_40, %c0_41], %52 {strides = array<i32>} : memref<8x256xf32, #tpu.memory_space<vmem>>, vector<4x256xf32>,
    %c4_42 = arith.constant 4 : index
    %c0_43 = arith.constant 0 : index
    %58 = vector.load %arg10[%c4_42, %c0_43] : memref<8x256xf32, #tpu.memory_space<vmem>>, vector<4x256xf32>
    tpu.vector_store %arg10[%c4_42, %c0_43], %28 {strides = array<i32>} : memref<8x256xf32, #tpu.memory_space<vmem>>, vector<4x256xf32>,
    %c64 = arith.constant 64 : index
    %c0_44 = arith.constant 0 : index
    %59 = vector.load %arg9[%c64, %c0_44] : memref<192x256xf32, #tpu.memory_space<vmem>>, vector<32x256xf32>
    %c2 = arith.constant 2 : index
    %c0_45 = arith.constant 0 : index
    %c0_46 = arith.constant 0 : index
    %60 = vector.load %arg5[%c2, %c0_45, %c0_46] : memref<6x32x8xf32, #tpu.memory_space<vmem>>, vector<1x32x8xf32>
    %61 = vector.shape_cast %60 : vector<1x32x8xf32> to vector<32x8xf32>
    %c0_47 = arith.constant 0 : index
    %c0_48 = arith.constant 0 : index
    %62 = vector.load %arg10[%c0_47, %c0_48] : memref<8x256xf32, #tpu.memory_space<vmem>>, vector<8x256xf32>
    %cst_49 = arith.constant dense<0.000000e+00> : vector<32x256xf32>
    %63 = tpu.matmul %61, %62, %cst_49 {dimension_numbers = #tpu.dot_dimension_numbers<[1], [0], [0], [1], [0, 0, 1, 1], [], []>} : vector<32x8xf32>, vector<8x256xf32>, vector<32x256xf32> -> vector<32x256xf32>
    %64 = arith.addf %59, %63 : vector<32x256xf32>
    %cst_50 = arith.constant 0.000000e+00 : f32
    %65 = vector.broadcast %cst_50 : f32 to vector<32x256xf32>
    %66 = arith.maximumf %64, %65 : vector<32x256xf32>
    %c2_51 = arith.constant 2 : index
    %c0_52 = arith.constant 0 : index
    %c0_53 = arith.constant 0 : index
    %67 = vector.load %arg6[%c2_51, %c0_52, %c0_53] : memref<6x4x32xf32, #tpu.memory_space<vmem>>, vector<1x4x32xf32>
    %68 = vector.shape_cast %67 : vector<1x4x32xf32> to vector<4x32xf32>
    %cst_54 = arith.constant dense<0.000000e+00> : vector<4x256xf32>
    %69 = tpu.matmul %68, %66, %cst_54 {dimension_numbers = #tpu.dot_dimension_numbers<[1], [0], [0], [1], [0, 0, 1, 1], [], []>} : vector<4x32xf32>, vector<32x256xf32>, vector<4x256xf32> -> vector<4x256xf32>
    %c2_55 = arith.constant 2 : index
    %c0_56 = arith.constant 0 : index
    %c0_57 = arith.constant 0 : index
    %70 = vector.load %arg7[%c2_55, %c0_56, %c0_57] : memref<6x4x1xf32, #tpu.memory_space<vmem>>, vector<1x4x1xf32>
    %71 = vector.shape_cast %70 : vector<1x4x1xf32> to vector<4x1xf32>
    %72 = vector.broadcast %71 : vector<4x1xf32> to vector<4x256xf32>
    %73 = arith.addf %69, %72 : vector<4x256xf32>
    %74 = arith.negf %73 : vector<4x256xf32>
    %75 = math.exp %74 : vector<4x256xf32>
    %cst_58 = arith.constant 1.000000e+00 : f32
    %76 = vector.broadcast %cst_58 : f32 to vector<4x256xf32>
    %77 = arith.addf %76, %75 : vector<4x256xf32>
    %78 = arith.divf %76, %77 : vector<4x256xf32>
    %79 = arith.mulf %78, %28 : vector<4x256xf32>
    %80 = arith.addf %79, %52 : vector<4x256xf32>
    %cst_59 = arith.constant 2.000000e+00 : f32
    %81 = vector.broadcast %cst_59 : f32 to vector<4x256xf32>
    %82 = arith.mulf %81, %1 : vector<4x256xf32>
    %83 = arith.mulf %82, %56 : vector<4x256xf32>
    %84 = arith.subf %83, %28 : vector<4x256xf32>
    %c0_60 = arith.constant 0 : index
    %c0_61 = arith.constant 0 : index
    %85 = vector.load %arg10[%c0_60, %c0_61] : memref<8x256xf32, #tpu.memory_space<vmem>>, vector<4x256xf32>
    tpu.vector_store %arg10[%c0_60, %c0_61], %80 {strides = array<i32>} : memref<8x256xf32, #tpu.memory_space<vmem>>, vector<4x256xf32>,
    %c4_62 = arith.constant 4 : index
    %c0_63 = arith.constant 0 : index
    %86 = vector.load %arg10[%c4_62, %c0_63] : memref<8x256xf32, #tpu.memory_space<vmem>>, vector<4x256xf32>
    tpu.vector_store %arg10[%c4_62, %c0_63], %56 {strides = array<i32>} : memref<8x256xf32, #tpu.memory_space<vmem>>, vector<4x256xf32>,
    %c96 = arith.constant 96 : index
    %c0_64 = arith.constant 0 : index
    %87 = vector.load %arg9[%c96, %c0_64] : memref<192x256xf32, #tpu.memory_space<vmem>>, vector<32x256xf32>
    %c3 = arith.constant 3 : index
    %c0_65 = arith.constant 0 : index
    %c0_66 = arith.constant 0 : index
    %88 = vector.load %arg5[%c3, %c0_65, %c0_66] : memref<6x32x8xf32, #tpu.memory_space<vmem>>, vector<1x32x8xf32>
    %89 = vector.shape_cast %88 : vector<1x32x8xf32> to vector<32x8xf32>
    %c0_67 = arith.constant 0 : index
    %c0_68 = arith.constant 0 : index
    %90 = vector.load %arg10[%c0_67, %c0_68] : memref<8x256xf32, #tpu.memory_space<vmem>>, vector<8x256xf32>
    %cst_69 = arith.constant dense<0.000000e+00> : vector<32x256xf32>
    %91 = tpu.matmul %89, %90, %cst_69 {dimension_numbers = #tpu.dot_dimension_numbers<[1], [0], [0], [1], [0, 0, 1, 1], [], []>} : vector<32x8xf32>, vector<8x256xf32>, vector<32x256xf32> -> vector<32x256xf32>
    %92 = arith.addf %87, %91 : vector<32x256xf32>
    %cst_70 = arith.constant 0.000000e+00 : f32
    %93 = vector.broadcast %cst_70 : f32 to vector<32x256xf32>
    %94 = arith.maximumf %92, %93 : vector<32x256xf32>
    %c3_71 = arith.constant 3 : index
    %c0_72 = arith.constant 0 : index
    %c0_73 = arith.constant 0 : index
    %95 = vector.load %arg6[%c3_71, %c0_72, %c0_73] : memref<6x4x32xf32, #tpu.memory_space<vmem>>, vector<1x4x32xf32>
    %96 = vector.shape_cast %95 : vector<1x4x32xf32> to vector<4x32xf32>
    %cst_74 = arith.constant dense<0.000000e+00> : vector<4x256xf32>
    %97 = tpu.matmul %96, %94, %cst_74 {dimension_numbers = #tpu.dot_dimension_numbers<[1], [0], [0], [1], [0, 0, 1, 1], [], []>} : vector<4x32xf32>, vector<32x256xf32>, vector<4x256xf32> -> vector<4x256xf32>
    %c3_75 = arith.constant 3 : index
    %c0_76 = arith.constant 0 : index
    %c0_77 = arith.constant 0 : index
    %98 = vector.load %arg7[%c3_75, %c0_76, %c0_77] : memref<6x4x1xf32, #tpu.memory_space<vmem>>, vector<1x4x1xf32>
    %99 = vector.shape_cast %98 : vector<1x4x1xf32> to vector<4x1xf32>
    %100 = vector.broadcast %99 : vector<4x1xf32> to vector<4x256xf32>
    %101 = arith.addf %97, %100 : vector<4x256xf32>
    %102 = arith.negf %101 : vector<4x256xf32>
    %103 = math.exp %102 : vector<4x256xf32>
    %cst_78 = arith.constant 1.000000e+00 : f32
    %104 = vector.broadcast %cst_78 : f32 to vector<4x256xf32>
    %105 = arith.addf %104, %103 : vector<4x256xf32>
    %106 = arith.divf %104, %105 : vector<4x256xf32>
    %107 = arith.mulf %106, %56 : vector<4x256xf32>
    %108 = arith.addf %107, %80 : vector<4x256xf32>
    %cst_79 = arith.constant 2.000000e+00 : f32
    %109 = vector.broadcast %cst_79 : f32 to vector<4x256xf32>
    %110 = arith.mulf %109, %1 : vector<4x256xf32>
    %111 = arith.mulf %110, %84 : vector<4x256xf32>
    %112 = arith.subf %111, %56 : vector<4x256xf32>
    %c0_80 = arith.constant 0 : index
    %c0_81 = arith.constant 0 : index
    %113 = vector.load %arg10[%c0_80, %c0_81] : memref<8x256xf32, #tpu.memory_space<vmem>>, vector<4x256xf32>
    tpu.vector_store %arg10[%c0_80, %c0_81], %108 {strides = array<i32>} : memref<8x256xf32, #tpu.memory_space<vmem>>, vector<4x256xf32>,
    %c4_82 = arith.constant 4 : index
    %c0_83 = arith.constant 0 : index
    %114 = vector.load %arg10[%c4_82, %c0_83] : memref<8x256xf32, #tpu.memory_space<vmem>>, vector<4x256xf32>
    tpu.vector_store %arg10[%c4_82, %c0_83], %84 {strides = array<i32>} : memref<8x256xf32, #tpu.memory_space<vmem>>, vector<4x256xf32>,
    %c128 = arith.constant 128 : index
    %c0_84 = arith.constant 0 : index
    %115 = vector.load %arg9[%c128, %c0_84] : memref<192x256xf32, #tpu.memory_space<vmem>>, vector<32x256xf32>
    %c4_85 = arith.constant 4 : index
    %c0_86 = arith.constant 0 : index
    %c0_87 = arith.constant 0 : index
    %116 = vector.load %arg5[%c4_85, %c0_86, %c0_87] : memref<6x32x8xf32, #tpu.memory_space<vmem>>, vector<1x32x8xf32>
    %117 = vector.shape_cast %116 : vector<1x32x8xf32> to vector<32x8xf32>
    %c0_88 = arith.constant 0 : index
    %c0_89 = arith.constant 0 : index
    %118 = vector.load %arg10[%c0_88, %c0_89] : memref<8x256xf32, #tpu.memory_space<vmem>>, vector<8x256xf32>
    %cst_90 = arith.constant dense<0.000000e+00> : vector<32x256xf32>
    %119 = tpu.matmul %117, %118, %cst_90 {dimension_numbers = #tpu.dot_dimension_numbers<[1], [0], [0], [1], [0, 0, 1, 1], [], []>} : vector<32x8xf32>, vector<8x256xf32>, vector<32x256xf32> -> vector<32x256xf32>
    %120 = arith.addf %115, %119 : vector<32x256xf32>
    %cst_91 = arith.constant 0.000000e+00 : f32
    %121 = vector.broadcast %cst_91 : f32 to vector<32x256xf32>
    %122 = arith.maximumf %120, %121 : vector<32x256xf32>
    %c4_92 = arith.constant 4 : index
    %c0_93 = arith.constant 0 : index
    %c0_94 = arith.constant 0 : index
    %123 = vector.load %arg6[%c4_92, %c0_93, %c0_94] : memref<6x4x32xf32, #tpu.memory_space<vmem>>, vector<1x4x32xf32>
    %124 = vector.shape_cast %123 : vector<1x4x32xf32> to vector<4x32xf32>
    %cst_95 = arith.constant dense<0.000000e+00> : vector<4x256xf32>
    %125 = tpu.matmul %124, %122, %cst_95 {dimension_numbers = #tpu.dot_dimension_numbers<[1], [0], [0], [1], [0, 0, 1, 1], [], []>} : vector<4x32xf32>, vector<32x256xf32>, vector<4x256xf32> -> vector<4x256xf32>
    %c4_96 = arith.constant 4 : index
    %c0_97 = arith.constant 0 : index
    %c0_98 = arith.constant 0 : index
    %126 = vector.load %arg7[%c4_96, %c0_97, %c0_98] : memref<6x4x1xf32, #tpu.memory_space<vmem>>, vector<1x4x1xf32>
    %127 = vector.shape_cast %126 : vector<1x4x1xf32> to vector<4x1xf32>
    %128 = vector.broadcast %127 : vector<4x1xf32> to vector<4x256xf32>
    %129 = arith.addf %125, %128 : vector<4x256xf32>
    %130 = arith.negf %129 : vector<4x256xf32>
    %131 = math.exp %130 : vector<4x256xf32>
    %cst_99 = arith.constant 1.000000e+00 : f32
    %132 = vector.broadcast %cst_99 : f32 to vector<4x256xf32>
    %133 = arith.addf %132, %131 : vector<4x256xf32>
    %134 = arith.divf %132, %133 : vector<4x256xf32>
    %135 = arith.mulf %134, %84 : vector<4x256xf32>
    %136 = arith.addf %135, %108 : vector<4x256xf32>
    %c0_100 = arith.constant 0 : index
    %c0_101 = arith.constant 0 : index
    %137 = vector.load %arg10[%c0_100, %c0_101] : memref<8x256xf32, #tpu.memory_space<vmem>>, vector<4x256xf32>
    tpu.vector_store %arg10[%c0_100, %c0_101], %136 {strides = array<i32>} : memref<8x256xf32, #tpu.memory_space<vmem>>, vector<4x256xf32>,
    %c4_102 = arith.constant 4 : index
    %c0_103 = arith.constant 0 : index
    %138 = vector.load %arg10[%c4_102, %c0_103] : memref<8x256xf32, #tpu.memory_space<vmem>>, vector<4x256xf32>
    tpu.vector_store %arg10[%c4_102, %c0_103], %112 {strides = array<i32>} : memref<8x256xf32, #tpu.memory_space<vmem>>, vector<4x256xf32>,
    %c160 = arith.constant 160 : index
    %c0_104 = arith.constant 0 : index
    %139 = vector.load %arg9[%c160, %c0_104] : memref<192x256xf32, #tpu.memory_space<vmem>>, vector<32x256xf32>
    %c5 = arith.constant 5 : index
    %c0_105 = arith.constant 0 : index
    %c0_106 = arith.constant 0 : index
    %140 = vector.load %arg5[%c5, %c0_105, %c0_106] : memref<6x32x8xf32, #tpu.memory_space<vmem>>, vector<1x32x8xf32>
    %141 = vector.shape_cast %140 : vector<1x32x8xf32> to vector<32x8xf32>
    %c0_107 = arith.constant 0 : index
    %c0_108 = arith.constant 0 : index
    %142 = vector.load %arg10[%c0_107, %c0_108] : memref<8x256xf32, #tpu.memory_space<vmem>>, vector<8x256xf32>
    %cst_109 = arith.constant dense<0.000000e+00> : vector<32x256xf32>
    %143 = tpu.matmul %141, %142, %cst_109 {dimension_numbers = #tpu.dot_dimension_numbers<[1], [0], [0], [1], [0, 0, 1, 1], [], []>} : vector<32x8xf32>, vector<8x256xf32>, vector<32x256xf32> -> vector<32x256xf32>
    %144 = arith.addf %139, %143 : vector<32x256xf32>
    %cst_110 = arith.constant 0.000000e+00 : f32
    %145 = vector.broadcast %cst_110 : f32 to vector<32x256xf32>
    %146 = arith.maximumf %144, %145 : vector<32x256xf32>
    %c5_111 = arith.constant 5 : index
    %c0_112 = arith.constant 0 : index
    %c0_113 = arith.constant 0 : index
    %147 = vector.load %arg6[%c5_111, %c0_112, %c0_113] : memref<6x4x32xf32, #tpu.memory_space<vmem>>, vector<1x4x32xf32>
    %148 = vector.shape_cast %147 : vector<1x4x32xf32> to vector<4x32xf32>
    %cst_114 = arith.constant dense<0.000000e+00> : vector<4x256xf32>
    %149 = tpu.matmul %148, %146, %cst_114 {dimension_numbers = #tpu.dot_dimension_numbers<[1], [0], [0], [1], [0, 0, 1, 1], [], []>} : vector<4x32xf32>, vector<32x256xf32>, vector<4x256xf32> -> vector<4x256xf32>
    %c5_115 = arith.constant 5 : index
    %c0_116 = arith.constant 0 : index
    %c0_117 = arith.constant 0 : index
    %150 = vector.load %arg7[%c5_115, %c0_116, %c0_117] : memref<6x4x1xf32, #tpu.memory_space<vmem>>, vector<1x4x1xf32>
    %151 = vector.shape_cast %150 : vector<1x4x1xf32> to vector<4x1xf32>
    %152 = vector.broadcast %151 : vector<4x1xf32> to vector<4x256xf32>
    %153 = arith.addf %149, %152 : vector<4x256xf32>
    %154 = arith.negf %153 : vector<4x256xf32>
    %155 = math.exp %154 : vector<4x256xf32>
    %cst_118 = arith.constant 1.000000e+00 : f32
    %156 = vector.broadcast %cst_118 : f32 to vector<4x256xf32>
    %157 = arith.addf %156, %155 : vector<4x256xf32>
    %158 = arith.divf %156, %157 : vector<4x256xf32>
    %159 = arith.mulf %158, %112 : vector<4x256xf32>
    %160 = arith.addf %159, %136 : vector<4x256xf32>
    %c0_119 = arith.constant 0 : index
    %c0_120 = arith.constant 0 : index
    %c0_121 = arith.constant 0 : index
    %161 = vector.load %arg8[%c0_119, %c0_120, %c0_121] : memref<1x4x256xf32, #tpu.memory_space<vmem>>, vector<1x4x256xf32>
    %162 = vector.shape_cast %161 : vector<1x4x256xf32> to vector<4x256xf32>
    %163 = vector.shape_cast %160 : vector<4x256xf32> to vector<1x4x256xf32>
    tpu.vector_store %arg8[%c0_119, %c0_120, %c0_121], %163 {strides = array<i32>} : memref<1x4x256xf32, #tpu.memory_space<vmem>>, vector<1x4x256xf32>,
    return
  }
  func.func @transform_0(%arg0: i32, %arg1: i32) -> (i32, i32, i32) {
    %c0_i32 = arith.constant 0 : i32
    %c0_i32_0 = arith.constant 0 : i32
    return %arg0, %c0_i32, %arg1 : i32, i32, i32
  }
  func.func @transform_1(%arg0: i32, %arg1: i32) -> (i32, i32) {
    %c0_i32 = arith.constant 0 : i32
    %c0_i32_0 = arith.constant 0 : i32
    %c0_i32_1 = arith.constant 0 : i32
    return %c0_i32, %c0_i32_0 : i32, i32
  }
  func.func @transform_2(%arg0: i32, %arg1: i32) -> (i32, i32) {
    %c0_i32 = arith.constant 0 : i32
    %c0_i32_0 = arith.constant 0 : i32
    %c0_i32_1 = arith.constant 0 : i32
    return %c0_i32, %c0_i32_0 : i32, i32
  }
  func.func @transform_3(%arg0: i32, %arg1: i32) -> (i32, i32, i32) {
    %c0_i32 = arith.constant 0 : i32
    %c0_i32_0 = arith.constant 0 : i32
    %c0_i32_1 = arith.constant 0 : i32
    %c0_i32_2 = arith.constant 0 : i32
    return %c0_i32, %c0_i32_0, %c0_i32_1 : i32, i32, i32
  }
  func.func @transform_4(%arg0: i32, %arg1: i32) -> (i32, i32, i32) {
    %c0_i32 = arith.constant 0 : i32
    %c0_i32_0 = arith.constant 0 : i32
    %c0_i32_1 = arith.constant 0 : i32
    %c0_i32_2 = arith.constant 0 : i32
    return %c0_i32, %c0_i32_0, %c0_i32_1 : i32, i32, i32
  }
  func.func @transform_5(%arg0: i32, %arg1: i32) -> (i32, i32, i32) {
    %c0_i32 = arith.constant 0 : i32
    %c0_i32_0 = arith.constant 0 : i32
    %c0_i32_1 = arith.constant 0 : i32
    %c0_i32_2 = arith.constant 0 : i32
    return %c0_i32, %c0_i32_0, %c0_i32_1 : i32, i32, i32
  }
  func.func @transform_6(%arg0: i32, %arg1: i32) -> (i32, i32, i32) {
    %c0_i32 = arith.constant 0 : i32
    %c0_i32_0 = arith.constant 0 : i32
    return %arg0, %c0_i32, %arg1 : i32, i32, i32
  }
}

</mosaic_0001>

<llo_original>
// kernel: tpu_custom_call.1
$region0: #{tpu_custom_call.1}
  #allocation0 [shape = 'u32[]', space=smem, size = 0x4, offset = 0x4, fixed_abs, tag = 'smem constant byte address 0x4 - core index']
  #allocation1 [shape = 'u32[72,128]{1,0:T(1,128)}', space=vmem, size = 0x9000, scoped, tag = 'internal scratch']
  #allocation2 [shape = 'f32[192,256]{1,0:T(8,128)}', space=vmem, size = 0x30000, scoped, tag = 'scratch operand']
  #allocation3 [shape = 'f32[8,256]{1,0:T(8,128)}', space=vmem, size = 0x2000, scoped, tag = 'scratch operand']
  %s0 = inlined_call_operand.vmem [shape: f32[2,4,256], index: 0, kind: input, shape index: {}]
  %s1 = inlined_call_operand.vmem [shape: f32[192,4], index: 1, kind: input, shape index: {}]
  %s2 = inlined_call_operand.vmem [shape: f32[192,1], index: 2, kind: input, shape index: {}]
  %s3 = inlined_call_operand.vmem [shape: f32[6,32,8], index: 3, kind: input, shape index: {}]
  %s4 = inlined_call_operand.vmem [shape: f32[6,4,32], index: 4, kind: input, shape index: {}]
  %s5 = inlined_call_operand.vmem [shape: f32[6,4,1], index: 5, kind: input, shape index: {}]
  %s6 = inlined_call_operand.hbm [shape: f32[2,4,256], index: 6, kind: output, shape index: {}]
  %s7 = sld [smem:[#allocation0]]
  $region57: #{tpu_custom_call.1} parent=0
    _
  %s9 = ssub.s32 1, %s7
  %s10 = scalar_select 0, %s9, %s7
  $region1: #{tpu_custom_call.1} parent=0
    #allocation4 [shape = 'u8[8192]{0}', space=vmem, size = 0x2000, scoped, tag = 'output window, operand 0']
    #allocation5 [shape = 's32[2]{0}', space=sflag, size = 0x8, scoped, tag = 'scoped memory for tpu_custom_call.1']
    %11 = vsyncpa [#allocation5], 0
    %s12 = scalar_lea.sflag [#allocation5], 1
    %13 = vsyncpa %s12, 0
    loop: start=0, step=1, limit=4
    $region2: #{tpu_custom_call.1} parent=1 // loop_pre_header
      _
    $region3: #{tpu_custom_call.1} parent=1 // loop_header
      %s15 = sphi 0, %s19
      %p16 = scmp.ge.s32.totalorder %s15, 4
      %s22 = sphi 0, %s34
      %s23 = sphi 0, %s30
      %s24 = sphi 0, %s22
      %s25 = sphi 0, %s23
      %s26 = sphi 0, %s24
      %s27 = sphi 0, %s25
      %s39 = sphi 0, %s41
      %s42 = sphi 0, %s39
      %s43 = sphi 0, %s42
      %s59 = sphi 0, %s43
      %s63 = sphi 0, %s63
      %s65 = sphi 0, %s63
      %s66 = sphi 0, %s65
      %s80 = sphi 0, %s66
      %s84 = sphi 0, %s84
      %s86 = sphi 0, %s84
      %s87 = sphi 0, %s86
      %s101 = sphi 0, %s87
      %s105 = sphi 0, %s105
      %s107 = sphi 0, %s105
      %s108 = sphi 0, %s107
      %s122 = sphi 0, %s108
      %s126 = sphi 0, %s126
      %s128 = sphi 0, %s126
      %s129 = sphi 0, %s128
      %s143 = sphi 0, %s129
      %s147 = sphi 0, %s147
      %s149 = sphi 0, %s147
      %s150 = sphi 0, %s149
      %s164 = sphi 0, %s150
      %s172 = sphi 0, %s174
      %s175 = sphi 0, %s172
      %s176 = sphi 0, %s175
      %s192 = sphi 0, %s176
    $region4: #{tpu_custom_call.1} parent=1 // loop_header_branch
      %18 = sbr.rel (%p16) target = $region8
    $region5: #{tpu_custom_call.1} parent=1 // loop_body
      %s20 = ssub.s32 %s15, 1
      %s21 = ssub.s32 %s15, 2
      %s28 = sadd.s32 1, %s23
      %p29 = scmp.ge.s32.totalorder %s28, 1
      %s30 = scalar_select %p29, 0, %s28
      %s31 = sadd.s32 1, %s22
      %s32 = scalar_select %p29, %s31, %s22
      %p33 = scmp.ge.s32.totalorder %s32, 2
      %s34 = scalar_select %p33, 0, %s32
      %s35 = ssub.s32 %s22, %s34
      %s36 = ssub.s32 %s23, %s30
      %s37 = sor.u32 %s35, %s36
      %p38 = scmp.eq.s32.totalorder %s37, 0
      %s40 = sadd.s32 %s39, 1
      %s41 = scalar_select %p38, %s39, %s40
      %p44 = pneg %p38
      %p45 = scmp.eq.s32.totalorder %s15, 1
      %p46 = por %p44, %p45
      %p47 = scmp.ne.s32.totalorder %s39, %s42
      %p48 = scmp.eq.s32.totalorder %s15, 0
      %p49 = por %p47, %p48
      %p50 = scmp.ne.s32.totalorder %s39, %s42
      %p51 = scmp.eq.s32.totalorder %s20, 1
      %p52 = por %p50, %p51
      %p53 = scmp.ne.s32.totalorder %s42, %s43
      %p54 = scmp.eq.s32.totalorder %s20, 0
      %p55 = por %p53, %p54
      %p56 = scmp.ne.s32.totalorder %s42, %s43
      %p57 = scmp.eq.s32.totalorder %s21, 1
      %p58 = por %p56, %p57
      %p60 = scmp.ne.s32.totalorder %s43, %s59
      %p61 = scmp.eq.s32.totalorder %s21, 0
      %p62 = por %p60, %p61
      %s64 = sadd.s32 %s63, 1
      %p67 = scmp.eq.s32.totalorder %s15, 1
      %p68 = scmp.ne.s32.totalorder %s63, %s65
      %p69 = scmp.eq.s32.totalorder %s15, 0
      %p70 = por %p68, %p69
      %p71 = scmp.ne.s32.totalorder %s63, %s65
      %p72 = scmp.eq.s32.totalorder %s20, 1
      %p73 = por %p71, %p72
      %p74 = scmp.ne.s32.totalorder %s65, %s66
      %p75 = scmp.eq.s32.totalorder %s20, 0
      %p76 = por %p74, %p75
      %p77 = scmp.ne.s32.totalorder %s65, %s66
      %p78 = scmp.eq.s32.totalorder %s21, 1
      %p79 = por %p77, %p78
      %p81 = scmp.ne.s32.totalorder %s66, %s80
      %p82 = scmp.eq.s32.totalorder %s21, 0
      %p83 = por %p81, %p82
      %s85 = sadd.s32 %s84, 1
      %p88 = scmp.eq.s32.totalorder %s15, 1
      %p89 = scmp.ne.s32.totalorder %s84, %s86
      %p90 = scmp.eq.s32.totalorder %s15, 0
      %p91 = por %p89, %p90
      %p92 = scmp.ne.s32.totalorder %s84, %s86
      %p93 = scmp.eq.s32.totalorder %s20, 1
      %p94 = por %p92, %p93
      %p95 = scmp.ne.s32.totalorder %s86, %s87
      %p96 = scmp.eq.s32.totalorder %s20, 0
      %p97 = por %p95, %p96
      %p98 = scmp.ne.s32.totalorder %s86, %s87
      %p99 = scmp.eq.s32.totalorder %s21, 1
      %p100 = por %p98, %p99
      %p102 = scmp.ne.s32.totalorder %s87, %s101
      %p103 = scmp.eq.s32.totalorder %s21, 0
      %p104 = por %p102, %p103
      %s106 = sadd.s32 %s105, 1
      %p109 = scmp.eq.s32.totalorder %s15, 1
      %p110 = scmp.ne.s32.totalorder %s105, %s107
      %p111 = scmp.eq.s32.totalorder %s15, 0
      %p112 = por %p110, %p111
      %p113 = scmp.ne.s32.totalorder %s105, %s107
      %p114 = scmp.eq.s32.totalorder %s20, 1
      %p115 = por %p113, %p114
      %p116 = scmp.ne.s32.totalorder %s107, %s108
      %p117 = scmp.eq.s32.totalorder %s20, 0
      %p118 = por %p116, %p117
      %p119 = scmp.ne.s32.totalorder %s107, %s108
      %p120 = scmp.eq.s32.totalorder %s21, 1
      %p121 = por %p119, %p120
      %p123 = scmp.ne.s32.totalorder %s108, %s122
      %p124 = scmp.eq.s32.totalorder %s21, 0
      %p125 = por %p123, %p124
      %s127 = sadd.s32 %s126, 1
      %p130 = scmp.eq.s32.totalorder %s15, 1
      %p131 = scmp.ne.s32.totalorder %s126, %s128
      %p132 = scmp.eq.s32.totalorder %s15, 0
      %p133 = por %p131, %p132
      %p134 = scmp.ne.s32.totalorder %s126, %s128
      %p135 = scmp.eq.s32.totalorder %s20, 1
      %p136 = por %p134, %p135
      %p137 = scmp.ne.s32.totalorder %s128, %s129
      %p138 = scmp.eq.s32.totalorder %s20, 0
      %p139 = por %p137, %p138
      %p140 = scmp.ne.s32.totalorder %s128, %s129
      %p141 = scmp.eq.s32.totalorder %s21, 1
      %p142 = por %p140, %p141
      %p144 = scmp.ne.s32.totalorder %s129, %s143
      %p145 = scmp.eq.s32.totalorder %s21, 0
      %p146 = por %p144, %p145
      %s148 = sadd.s32 %s147, 1
      %p151 = scmp.eq.s32.totalorder %s15, 1
      %p152 = scmp.ne.s32.totalorder %s147, %s149
      %p153 = scmp.eq.s32.totalorder %s15, 0
      %p154 = por %p152, %p153
      %p155 = scmp.ne.s32.totalorder %s147, %s149
      %p156 = scmp.eq.s32.totalorder %s20, 1
      %p157 = por %p155, %p156
      %p158 = scmp.ne.s32.totalorder %s149, %s150
      %p159 = scmp.eq.s32.totalorder %s20, 0
      %p160 = por %p158, %p159
      %p161 = scmp.ne.s32.totalorder %s149, %s150
      %p162 = scmp.eq.s32.totalorder %s21, 1
      %p163 = por %p161, %p162
      %p165 = scmp.ne.s32.totalorder %s150, %s164
      %p166 = scmp.eq.s32.totalorder %s21, 0
      %p167 = por %p165, %p166
      %s168 = ssub.s32 %s22, %s34
      %s169 = ssub.s32 %s23, %s30
      %s170 = sor.u32 %s168, %s169
      %p171 = scmp.eq.s32.totalorder %s170, 0
      %s173 = sadd.s32 %s172, 1
      %s174 = scalar_select %p171, %s172, %s173
      %p177 = pneg %p171
      %p178 = scmp.eq.s32.totalorder %s15, 1
      %p179 = por %p177, %p178
      %p180 = scmp.ne.s32.totalorder %s172, %s175
      %p181 = scmp.eq.s32.totalorder %s15, 0
      %p182 = por %p180, %p181
      %p183 = scmp.ne.s32.totalorder %s172, %s175
      %p184 = scmp.eq.s32.totalorder %s20, 1
      %p185 = por %p183, %p184
      %p186 = scmp.ne.s32.totalorder %s175, %s176
      %p187 = scmp.eq.s32.totalorder %s20, 0
      %p188 = por %p186, %p187
      %p189 = scmp.ne.s32.totalorder %s175, %s176
      %p190 = scmp.eq.s32.totalorder %s21, 1
      %p191 = por %p189, %p190
      %p193 = scmp.ne.s32.totalorder %s176, %s192
      %p194 = scmp.eq.s32.totalorder %s21, 0
      %p195 = por %p193, %p194
      %p196 = scmp.le.s32.totalorder 1, %s15
      %p197 = scmp.lt.s32.totalorder %s15, 3
      %p198 = pnand %p196, %p197
      %p199 = pneg %p198
      // Predicated region
      $region9: #{tpu_custom_call.1} parent=5 // pred_check
        _
      $region10: #{tpu_custom_call.1} parent=5 // pred_check_branch
        %201 = sbr.rel (%p198) target = $region12
      $region11: #{tpu_custom_call.1} parent=5 // pred_region
        %s202 = ssub.s32 %s15, 1
        // Predicated region
        $region13: #{tpu_custom_call.1} parent=11 // pred_check
          %p203 = pneg %p76
        $region14: #{tpu_custom_call.1} parent=11 // pred_check_branch
          %205 = sbr.rel (%p203) target = $region16
        $region15: #{tpu_custom_call.1} parent=11 // pred_region
          _
        $region16: #{tpu_custom_call.1} parent=11 // pred_fallthru
          _
        // Predicated region
        $region17: #{tpu_custom_call.1} parent=11 // pred_check
          %p206 = pneg %p97
        $region18: #{tpu_custom_call.1} parent=11 // pred_check_branch
          %208 = sbr.rel (%p206) target = $region20
        $region19: #{tpu_custom_call.1} parent=11 // pred_region
          _
        $region20: #{tpu_custom_call.1} parent=11 // pred_fallthru
          _
        // Predicated region
        $region21: #{tpu_custom_call.1} parent=11 // pred_check
          %p209 = pneg %p118
        $region22: #{tpu_custom_call.1} parent=11 // pred_check_branch
          %211 = sbr.rel (%p209) target = $region24
        $region23: #{tpu_custom_call.1} parent=11 // pred_region
          _
        $region24: #{tpu_custom_call.1} parent=11 // pred_fallthru
          _
        // Predicated region
        $region25: #{tpu_custom_call.1} parent=11 // pred_check
          %p212 = pneg %p139
        $region26: #{tpu_custom_call.1} parent=11 // pred_check_branch
          %214 = sbr.rel (%p212) target = $region28
        $region27: #{tpu_custom_call.1} parent=11 // pred_region
          _
        $region28: #{tpu_custom_call.1} parent=11 // pred_fallthru
          _
        // Predicated region
        $region29: #{tpu_custom_call.1} parent=11 // pred_check
          %p215 = pneg %p160
        $region30: #{tpu_custom_call.1} parent=11 // pred_check_branch
          %217 = sbr.rel (%p215) target = $region32
        $region31: #{tpu_custom_call.1} parent=11 // pred_region
          _
        $region32: #{tpu_custom_call.1} parent=11 // pred_fallthru
          _
      $region12: #{tpu_custom_call.1} parent=5 // pred_fallthru
        _
      %p218 = scmp.lt.s32.totalorder %s15, 2
      // Predicated region
      $region33: #{tpu_custom_call.1} parent=5 // pred_check
        %p219 = pneg %p218
      $region34: #{tpu_custom_call.1} parent=5 // pred_check_branch
        %221 = sbr.rel (%p219) target = $region36
      $region35: #{tpu_custom_call.1} parent=5 // pred_region
        // Predicated region
        $region37: #{tpu_custom_call.1} parent=35 // pred_check
          %p222 = pneg %p49
        $region38: #{tpu_custom_call.1} parent=35 // pred_check_branch
          %224 = sbr.rel (%p222) target = $region40
        $region39: #{tpu_custom_call.1} parent=35 // pred_region
          %s225 = smul.u32 2, %s23
          %p226 = scmp.lt.s32.totalorder %s22, 1
          %s227 = scalar_select %p226, %s22, 1
          %p228 = scmp.lt.s32.totalorder %s225, 1
          %s229 = scalar_select %p228, %s225, 1
          %s230 = smul.addr %s227, 2
          %s231 = sadd.s32 %s229, %s230
          %s232 = smul.addr %s231, 4
          %s233 = scalar_lea.vmem %s0, %s232
          %s234 = smul.u32 2, %s23
        $region40: #{tpu_custom_call.1} parent=35 // pred_fallthru
          _
      $region36: #{tpu_custom_call.1} parent=5 // pred_fallthru
        _
      %p235 = scmp.le.s32.totalorder 1, %s15
      %p236 = scmp.lt.s32.totalorder %s15, 3
      %p237 = pnand %p235, %p236
      %p238 = pneg %p237
      // Predicated region
      $region41: #{tpu_custom_call.1} parent=5 // pred_check
        _
      $region42: #{tpu_custom_call.1} parent=5 // pred_check_branch
        %240 = sbr.rel (%p237) target = $region44
      $region43: #{tpu_custom_call.1} parent=5 // pred_region
        %s241 = ssub.s32 %s15, 1
        %s242 = smul.u32 2, %s25
        %p243 = scmp.lt.s32.totalorder %s24, 1
        %s244 = scalar_select %p243, %s24, 1
        %p245 = scmp.lt.s32.totalorder %s242, 1
        %s246 = scalar_select %p245, %s242, 1
        %s247 = smul.addr %s244, 2
        %s248 = sadd.s32 %s246, %s247
        %s249 = smul.addr %s248, 4
        %s250 = scalar_lea.vmem %s0, %s249
        %p251 = pneg %p55
        %p252 = pneg %p52
        %p253 = pneg %p76
        %p254 = pneg %p73
        %p255 = pneg %p97
        %p256 = pneg %p94
        %p257 = pneg %p118
        %p258 = pneg %p115
        %p259 = pneg %p139
        %p260 = pneg %p136
        %p261 = pneg %p160
        %p262 = pneg %p157
        %p263 = pneg %p188
        %p264 = pneg %p185
        %s265 = sand.u32 %s175, 1
        %s266 = scalar_lea.sflag [#allocation5], %s265
        %s267 = sand.u32 %s175, 1
        %s268 = smul.addr %s267, 8
        %s269 = scalar_lea.vmem [#allocation4], %s268
        %s270 = smul.u32 2, %s25
        %p271 = scmp.lt.s32.totalorder %s24, 1
        %s272 = scalar_select %p271, %s24, 1
        %p273 = scmp.lt.s32.totalorder %s270, 1
        %s274 = scalar_select %p273, %s270, 1
        %s275 = smul.addr %s272, 2
        %s276 = sadd.s32 %s274, %s275
        %s277 = smul.addr %s276, 4
        %s278 = scalar_lea.vmem %s0, %s277
        %s279 = smul.u32 2, %s25
        %s280 = smul.u32 2, %s25
        %v281 = vld [vmem:[%s278] sm:$0xff]
        %v282 = vld [vmem:[%s1] sm:$0xff]
        %v283 = vld [vmem:[%s1 + $0x8] sm:$0xff]
        %v284 = vld [vmem:[%s1 + $0x10] sm:$0xff]
        %v285 = vld [vmem:[%s1 + $0x18] sm:$0xff]
        %v286 = vld [vmem:[%s1 + $0x20] sm:$0xff]
        %v287 = vld [vmem:[%s1 + $0x28] sm:$0xff]
        %v288 = vld [vmem:[%s1 + $0x30] sm:$0xff]
        %v289 = vld [vmem:[%s1 + $0x38] sm:$0xff]
        %v290 = vld [vmem:[%s1 + $0x40] sm:$0xff]
        %v291 = vld [vmem:[%s1 + $0x48] sm:$0xff]
        %v292 = vld [vmem:[%s1 + $0x50] sm:$0xff]
        %v293 = vld [vmem:[%s1 + $0x58] sm:$0xff]
        %v294 = vld [vmem:[%s1 + $0x60] sm:$0xff]
        %v295 = vld [vmem:[%s1 + $0x68] sm:$0xff]
        %v296 = vld [vmem:[%s1 + $0x70] sm:$0xff]
        %v297 = vld [vmem:[%s1 + $0x78] sm:$0xff]
        %v298 = vld [vmem:[%s1 + $0x80] sm:$0xff]
        %v299 = vld [vmem:[%s1 + $0x88] sm:$0xff]
        %v300 = vld [vmem:[%s1 + $0x90] sm:$0xff]
        %v301 = vld [vmem:[%s1 + $0x98] sm:$0xff]
        %v302 = vld [vmem:[%s1 + $0xa0] sm:$0xff]
        %v303 = vld [vmem:[%s1 + $0xa8] sm:$0xff]
        %v304 = vld [vmem:[%s1 + $0xb0] sm:$0xff]
        %v305 = vld [vmem:[%s1 + $0xb8] sm:$0xff]
        %v306 = vld [vmem:[%s2] sm:$0xff]
        %v307 = vld [vmem:[%s2 + $0x8] sm:$0xff]
        %v308 = vld [vmem:[%s2 + $0x10] sm:$0xff]
        %v309 = vld [vmem:[%s2 + $0x18] sm:$0xff]
        %v310 = vld [vmem:[%s2 + $0x20] sm:$0xff]
        %v311 = vld [vmem:[%s2 + $0x28] sm:$0xff]
        %v312 = vld [vmem:[%s2 + $0x30] sm:$0xff]
        %v313 = vld [vmem:[%s2 + $0x38] sm:$0xff]
        %v314 = vld [vmem:[%s2 + $0x40] sm:$0xff]
        %v315 = vld [vmem:[%s2 + $0x48] sm:$0xff]
        %v316 = vld [vmem:[%s2 + $0x50] sm:$0xff]
        %v317 = vld [vmem:[%s2 + $0x58] sm:$0xff]
        %v318 = vld [vmem:[%s2 + $0x60] sm:$0xff]
        %v319 = vld [vmem:[%s2 + $0x68] sm:$0xff]
        %v320 = vld [vmem:[%s2 + $0x70] sm:$0xff]
        %v321 = vld [vmem:[%s2 + $0x78] sm:$0xff]
        %v322 = vld [vmem:[%s2 + $0x80] sm:$0xff]
        %v323 = vld [vmem:[%s2 + $0x88] sm:$0xff]
        %v324 = vld [vmem:[%s2 + $0x90] sm:$0xff]
        %v325 = vld [vmem:[%s2 + $0x98] sm:$0xff]
        %v326 = vld [vmem:[%s2 + $0xa0] sm:$0xff]
        %v327 = vld [vmem:[%s2 + $0xa8] sm:$0xff]
        %v328 = vld [vmem:[%s2 + $0xb0] sm:$0xff]
        %v329 = vld [vmem:[%s2 + $0xb8] sm:$0xff]
        %331 = vset.pattern.permute.xlu0 0
        %332 = vperm.xlu0 %331, %v306
        %v333 = vpop.permute.xlu0 %332
        %336 = vset.pattern.permute.xlu0 0
        %337 = vperm.xlu0 %336, %v307
        %v338 = vpop.permute.xlu0 %337
        %341 = vset.pattern.permute.xlu0 0
        %342 = vperm.xlu0 %341, %v308
        %v343 = vpop.permute.xlu0 %342
        %346 = vset.pattern.permute.xlu0 0
        %347 = vperm.xlu0 %346, %v309
        %v348 = vpop.permute.xlu0 %347
        %351 = vset.pattern.permute.xlu0 0
        %352 = vperm.xlu0 %351, %v310
        %v353 = vpop.permute.xlu0 %352
        %356 = vset.pattern.permute.xlu0 0
        %357 = vperm.xlu0 %356, %v311
        %v358 = vpop.permute.xlu0 %357
        %361 = vset.pattern.permute.xlu0 0
        %362 = vperm.xlu0 %361, %v312
        %v363 = vpop.permute.xlu0 %362
        %366 = vset.pattern.permute.xlu0 0
        %367 = vperm.xlu0 %366, %v313
        %v368 = vpop.permute.xlu0 %367
        %371 = vset.pattern.permute.xlu0 0
        %372 = vperm.xlu0 %371, %v314
        %v373 = vpop.permute.xlu0 %372
        %376 = vset.pattern.permute.xlu0 0
        %377 = vperm.xlu0 %376, %v315
        %v378 = vpop.permute.xlu0 %377
        %381 = vset.pattern.permute.xlu0 0
        %382 = vperm.xlu0 %381, %v316
        %v383 = vpop.permute.xlu0 %382
        %386 = vset.pattern.permute.xlu0 0
        %387 = vperm.xlu0 %386, %v317
        %v388 = vpop.permute.xlu0 %387
        %391 = vset.pattern.permute.xlu0 0
        %392 = vperm.xlu0 %391, %v318
        %v393 = vpop.permute.xlu0 %392
        %396 = vset.pattern.permute.xlu0 0
        %397 = vperm.xlu0 %396, %v319
        %v398 = vpop.permute.xlu0 %397
        %401 = vset.pattern.permute.xlu0 0
        %402 = vperm.xlu0 %401, %v320
        %v403 = vpop.permute.xlu0 %402
        %406 = vset.pattern.permute.xlu0 0
        %407 = vperm.xlu0 %406, %v321
        %v408 = vpop.permute.xlu0 %407
        %411 = vset.pattern.permute.xlu0 0
        %412 = vperm.xlu0 %411, %v322
        %v413 = vpop.permute.xlu0 %412
        %416 = vset.pattern.permute.xlu0 0
        %417 = vperm.xlu0 %416, %v323
        %v418 = vpop.permute.xlu0 %417
        %421 = vset.pattern.permute.xlu0 0
        %422 = vperm.xlu0 %421, %v324
        %v423 = vpop.permute.xlu0 %422
        %426 = vset.pattern.permute.xlu0 0
        %427 = vperm.xlu0 %426, %v325
        %v428 = vpop.permute.xlu0 %427
        %431 = vset.pattern.permute.xlu0 0
        %432 = vperm.xlu0 %431, %v326
        %v433 = vpop.permute.xlu0 %432
        %436 = vset.pattern.permute.xlu0 0
        %437 = vperm.xlu0 %436, %v327
        %v438 = vpop.permute.xlu0 %437
        %441 = vset.pattern.permute.xlu0 0
        %442 = vperm.xlu0 %441, %v328
        %v443 = vpop.permute.xlu0 %442
        %446 = vset.pattern.permute.xlu0 0
        %447 = vperm.xlu0 %446, %v329
        %v448 = vpop.permute.xlu0 %447
        %451 = vst [vmem:[#allocation1] ss:$2 sm:$0xff] %v281
        %v452 = vld.sshfl [vmem:[#allocation1] sm:$0xff pattern:$0x75316420]
        %v453 = vld.sshfl [vmem:[#allocation1 + $0x8] sm:$0xff pattern:$0x75316420]
        %vm454 = vcmask 31744
        %v456 = vsel %vm454, %v282, 0
        %v459 = vsel %vm454, %v283, 0
        %v462 = vsel %vm454, %v284, 0
        %v465 = vsel %vm454, %v285, 0
        %v468 = vsel %vm454, %v286, 0
        %v471 = vsel %vm454, %v287, 0
        %v474 = vsel %vm454, %v288, 0
        %v477 = vsel %vm454, %v289, 0
        %v480 = vsel %vm454, %v290, 0
        %v483 = vsel %vm454, %v291, 0
        %v486 = vsel %vm454, %v292, 0
        %v489 = vsel %vm454, %v293, 0
        %v492 = vsel %vm454, %v294, 0
        %v495 = vsel %vm454, %v295, 0
        %v498 = vsel %vm454, %v296, 0
        %v501 = vsel %vm454, %v297, 0
        %v504 = vsel %vm454, %v298, 0
        %v507 = vsel %vm454, %v299, 0
        %v510 = vsel %vm454, %v300, 0
        %v513 = vsel %vm454, %v301, 0
        %v516 = vsel %vm454, %v302, 0
        %v519 = vsel %vm454, %v303, 0
        %v522 = vsel %vm454, %v304, 0
        %v525 = vsel %vm454, %v305, 0
        %vm527 = vcmask 1043456
        %v528 = vsel %vm527, %v452, 0
        %v530 = vsel %vm527, %v453, 0
        %532 = vmatpush.msra.mxu0 0.0
        %533 = vmatpush.msra.mxu0 0.0
        %534 = vmatpush.msra.mxu0 0.0
        %535 = vmatpush.msra.mxu0 0.0
        %536 = vmatpush.msra.mxu0 0.0
        %537 = vmatpush.msra.mxu0 0.0
        %538 = vmatpush.msra.mxu0 0.0
        %539 = vmatpush.msra.mxu0 0.0
        %540 = vmatpush.msra.mxu0 0.0
        %541 = vmatpush.msra.mxu0 0.0
        %542 = vmatpush.msra.mxu0 0.0
        %543 = vmatpush.msra.mxu0 0.0
        %544 = vmatpush.msra.mxu0 0.0
        %545 = vmatpush.msra.mxu0 0.0
        %546 = vmatpush.msra.mxu0 0.0
        %547 = vmatpush.msra.mxu0 %v528
        %548 = vmatmul.f32.gmra.mxu0 %v456
        %v549 = vpop.f32.mrf.mxu0
        %v550 = vadd.f32 %v333, %v549
        %551 = vmatmul.f32.gmra.mxu0 %v459
        %v552 = vpop.f32.mrf.mxu0
        %v553 = vadd.f32 %v338, %v552
        %554 = vmatmul.f32.gmra.mxu0 %v462
        %v555 = vpop.f32.mrf.mxu0
        %v556 = vadd.f32 %v343, %v555
        %557 = vmatmul.f32.gmra.mxu0 %v465
        %v558 = vpop.f32.mrf.mxu0
        %v559 = vadd.f32 %v348, %v558
        %560 = vmatmul.f32.gmra.mxu0 %v468
        %v561 = vpop.f32.mrf.mxu0
        %v562 = vadd.f32 %v353, %v561
        %563 = vmatmul.f32.gmra.mxu0 %v471
        %v564 = vpop.f32.mrf.mxu0
        %v565 = vadd.f32 %v358, %v564
        %566 = vmatmul.f32.gmra.mxu0 %v474
        %v567 = vpop.f32.mrf.mxu0
        %v568 = vadd.f32 %v363, %v567
        %569 = vmatmul.f32.gmra.mxu0 %v477
        %v570 = vpop.f32.mrf.mxu0
        %v571 = vadd.f32 %v368, %v570
        %572 = vmatmul.f32.gmra.mxu0 %v480
        %v573 = vpop.f32.mrf.mxu0
        %v574 = vadd.f32 %v373, %v573
        %575 = vmatmul.f32.gmra.mxu0 %v483
        %v576 = vpop.f32.mrf.mxu0
        %v577 = vadd.f32 %v378, %v576
        %578 = vmatmul.f32.gmra.mxu0 %v486
        %v579 = vpop.f32.mrf.mxu0
        %v580 = vadd.f32 %v383, %v579
        %581 = vmatmul.f32.gmra.mxu0 %v489
        %v582 = vpop.f32.mrf.mxu0
        %v583 = vadd.f32 %v388, %v582
        %584 = vmatmul.f32.gmra.mxu0 %v492
        %v585 = vpop.f32.mrf.mxu0
        %v586 = vadd.f32 %v393, %v585
        %587 = vmatmul.f32.gmra.mxu0 %v495
        %v588 = vpop.f32.mrf.mxu0
        %v589 = vadd.f32 %v398, %v588
        %590 = vmatmul.f32.gmra.mxu0 %v498
        %v591 = vpop.f32.mrf.mxu0
        %v592 = vadd.f32 %v403, %v591
        %593 = vmatmul.f32.gmra.mxu0 %v501
        %v594 = vpop.f32.mrf.mxu0
        %v595 = vadd.f32 %v408, %v594
        %596 = vmatmul.f32.gmra.mxu0 %v504
        %v597 = vpop.f32.mrf.mxu0
        %v598 = vadd.f32 %v413, %v597
        %599 = vmatmul.f32.gmra.mxu0 %v507
        %v600 = vpop.f32.mrf.mxu0
        %v601 = vadd.f32 %v418, %v600
        %602 = vmatmul.f32.gmra.mxu0 %v510
        %v603 = vpop.f32.mrf.mxu0
        %v604 = vadd.f32 %v423, %v603
        %605 = vmatmul.f32.gmra.mxu0 %v513
        %v606 = vpop.f32.mrf.mxu0
        %v607 = vadd.f32 %v428, %v606
        %608 = vmatmul.f32.gmra.mxu0 %v516
        %v609 = vpop.f32.mrf.mxu0
        %v610 = vadd.f32 %v433, %v609
        %611 = vmatmul.f32.gmra.mxu0 %v519
        %v612 = vpop.f32.mrf.mxu0
        %v613 = vadd.f32 %v438, %v612
        %614 = vmatmul.f32.gmra.mxu0 %v522
        %v615 = vpop.f32.mrf.mxu0
        %v616 = vadd.f32 %v443, %v615
        %617 = vmatmul.f32.gmra.mxu0 %v525
        %v618 = vpop.f32.mrf.mxu0
        %v619 = vadd.f32 %v448, %v618
        %620 = vdwg.mxu0
        %621 = vmatpush.msra.mxu0 0.0
        %622 = vmatpush.msra.mxu0 0.0
        %623 = vmatpush.msra.mxu0 0.0
        %624 = vmatpush.msra.mxu0 0.0
        %625 = vmatpush.msra.mxu0 0.0
        %626 = vmatpush.msra.mxu0 0.0
        %627 = vmatpush.msra.mxu0 0.0
        %628 = vmatpush.msra.mxu0 0.0
        %629 = vmatpush.msra.mxu0 0.0
        %630 = vmatpush.msra.mxu0 0.0
        %631 = vmatpush.msra.mxu0 0.0
        %632 = vmatpush.msra.mxu0 0.0
        %633 = vmatpush.msra.mxu0 0.0
        %634 = vmatpush.msra.mxu0 0.0
        %635 = vmatpush.msra.mxu0 0.0
        %636 = vmatpush.msra.mxu0 %v530
        %637 = vmatmul.f32.gmra.mxu0 %v456
        %v638 = vpop.f32.mrf.mxu0
        %v639 = vadd.f32 %v333, %v638
        %640 = vmatmul.f32.gmra.mxu0 %v459
        %v641 = vpop.f32.mrf.mxu0
        %v642 = vadd.f32 %v338, %v641
        %643 = vmatmul.f32.gmra.mxu0 %v462
        %v644 = vpop.f32.mrf.mxu0
        %v645 = vadd.f32 %v343, %v644
        %646 = vmatmul.f32.gmra.mxu0 %v465
        %v647 = vpop.f32.mrf.mxu0
        %v648 = vadd.f32 %v348, %v647
        %649 = vmatmul.f32.gmra.mxu0 %v468
        %v650 = vpop.f32.mrf.mxu0
        %v651 = vadd.f32 %v353, %v650
        %652 = vmatmul.f32.gmra.mxu0 %v471
        %v653 = vpop.f32.mrf.mxu0
        %v654 = vadd.f32 %v358, %v653
        %655 = vmatmul.f32.gmra.mxu0 %v474
        %v656 = vpop.f32.mrf.mxu0
        %v657 = vadd.f32 %v363, %v656
        %658 = vmatmul.f32.gmra.mxu0 %v477
        %v659 = vpop.f32.mrf.mxu0
        %v660 = vadd.f32 %v368, %v659
        %661 = vmatmul.f32.gmra.mxu0 %v480
        %v662 = vpop.f32.mrf.mxu0
        %v663 = vadd.f32 %v373, %v662
        %664 = vmatmul.f32.gmra.mxu0 %v483
        %v665 = vpop.f32.mrf.mxu0
        %v666 = vadd.f32 %v378, %v665
        %667 = vmatmul.f32.gmra.mxu0 %v486
        %v668 = vpop.f32.mrf.mxu0
        %v669 = vadd.f32 %v383, %v668
        %670 = vmatmul.f32.gmra.mxu0 %v489
        %v671 = vpop.f32.mrf.mxu0
        %v672 = vadd.f32 %v388, %v671
        %673 = vmatmul.f32.gmra.mxu0 %v492
        %v674 = vpop.f32.mrf.mxu0
        %v675 = vadd.f32 %v393, %v674
        %676 = vmatmul.f32.gmra.mxu0 %v495
        %v677 = vpop.f32.mrf.mxu0
        %v678 = vadd.f32 %v398, %v677
        %679 = vmatmul.f32.gmra.mxu0 %v498
        %v680 = vpop.f32.mrf.mxu0
        %v681 = vadd.f32 %v403, %v680
        %682 = vmatmul.f32.gmra.mxu0 %v501
        %v683 = vpop.f32.mrf.mxu0
        %v684 = vadd.f32 %v408, %v683
        %685 = vmatmul.f32.gmra.mxu0 %v504
        %v686 = vpop.f32.mrf.mxu0
        %v687 = vadd.f32 %v413, %v686
        %688 = vmatmul.f32.gmra.mxu0 %v507
        %v689 = vpop.f32.mrf.mxu0
        %v690 = vadd.f32 %v418, %v689
        %691 = vmatmul.f32.gmra.mxu0 %v510
        %v692 = vpop.f32.mrf.mxu0
        %v693 = vadd.f32 %v423, %v692
        %694 = vmatmul.f32.gmra.mxu0 %v513
        %v695 = vpop.f32.mrf.mxu0
        %v696 = vadd.f32 %v428, %v695
        %697 = vmatmul.f32.gmra.mxu0 %v516
        %v698 = vpop.f32.mrf.mxu0
        %v699 = vadd.f32 %v433, %v698
        %700 = vmatmul.f32.gmra.mxu0 %v519
        %v701 = vpop.f32.mrf.mxu0
        %v702 = vadd.f32 %v438, %v701
        %703 = vmatmul.f32.gmra.mxu0 %v522
        %v704 = vpop.f32.mrf.mxu0
        %v705 = vadd.f32 %v443, %v704
        %706 = vmatmul.f32.gmra.mxu0 %v525
        %v707 = vpop.f32.mrf.mxu0
        %v708 = vadd.f32 %v448, %v707
        %709 = vdwg.mxu0
        %710 = vst [vmem:[#allocation2] sm:$0xff] %v550
        %711 = vst [vmem:[#allocation2 + $0x8] sm:$0xff] %v639
        %712 = vst [vmem:[#allocation2 + $0x10] sm:$0xff] %v553
        %713 = vst [vmem:[#allocation2 + $0x18] sm:$0xff] %v642
        %714 = vst [vmem:[#allocation2 + $0x20] sm:$0xff] %v556
        %715 = vst [vmem:[#allocation2 + $0x28] sm:$0xff] %v645
        %716 = vst [vmem:[#allocation2 + $0x30] sm:$0xff] %v559
        %717 = vst [vmem:[#allocation2 + $0x38] sm:$0xff] %v648
        %718 = vst [vmem:[#allocation2 + $0x40] sm:$0xff] %v562
        %719 = vst [vmem:[#allocation2 + $0x48] sm:$0xff] %v651
        %720 = vst [vmem:[#allocation2 + $0x50] sm:$0xff] %v565
        %721 = vst [vmem:[#allocation2 + $0x58] sm:$0xff] %v654
        %722 = vst [vmem:[#allocation2 + $0x60] sm:$0xff] %v568
        %723 = vst [vmem:[#allocation2 + $0x68] sm:$0xff] %v657
        %724 = vst [vmem:[#allocation2 + $0x70] sm:$0xff] %v571
        %725 = vst [vmem:[#allocation2 + $0x78] sm:$0xff] %v660
        %726 = vst [vmem:[#allocation2 + $0x80] sm:$0xff] %v574
        %727 = vst [vmem:[#allocation2 + $0x88] sm:$0xff] %v663
        %728 = vst [vmem:[#allocation2 + $0x90] sm:$0xff] %v577
        %729 = vst [vmem:[#allocation2 + $0x98] sm:$0xff] %v666
        %730 = vst [vmem:[#allocation2 + $0xa0] sm:$0xff] %v580
        %731 = vst [vmem:[#allocation2 + $0xa8] sm:$0xff] %v669
        %732 = vst [vmem:[#allocation2 + $0xb0] sm:$0xff] %v583
        %733 = vst [vmem:[#allocation2 + $0xb8] sm:$0xff] %v672
        %734 = vst [vmem:[#allocation2 + $0xc0] sm:$0xff] %v586
        %735 = vst [vmem:[#allocation2 + $0xc8] sm:$0xff] %v675
        %736 = vst [vmem:[#allocation2 + $0xd0] sm:$0xff] %v589
        %737 = vst [vmem:[#allocation2 + $0xd8] sm:$0xff] %v678
        %738 = vst [vmem:[#allocation2 + $0xe0] sm:$0xff] %v592
        %739 = vst [vmem:[#allocation2 + $0xe8] sm:$0xff] %v681
        %740 = vst [vmem:[#allocation2 + $0xf0] sm:$0xff] %v595
        %741 = vst [vmem:[#allocation2 + $0xf8] sm:$0xff] %v684
        %742 = vst [vmem:[#allocation2 + $0x100] sm:$0xff] %v598
        %743 = vst [vmem:[#allocation2 + $0x108] sm:$0xff] %v687
        %744 = vst [vmem:[#allocation2 + $0x110] sm:$0xff] %v601
        %745 = vst [vmem:[#allocation2 + $0x118] sm:$0xff] %v690
        %746 = vst [vmem:[#allocation2 + $0x120] sm:$0xff] %v604
        %747 = vst [vmem:[#allocation2 + $0x128] sm:$0xff] %v693
        %748 = vst [vmem:[#allocation2 + $0x130] sm:$0xff] %v607
        %749 = vst [vmem:[#allocation2 + $0x138] sm:$0xff] %v696
        %750 = vst [vmem:[#allocation2 + $0x140] sm:$0xff] %v610
        %751 = vst [vmem:[#allocation2 + $0x148] sm:$0xff] %v699
        %752 = vst [vmem:[#allocation2 + $0x150] sm:$0xff] %v613
        %753 = vst [vmem:[#allocation2 + $0x158] sm:$0xff] %v702
        %754 = vst [vmem:[#allocation2 + $0x160] sm:$0xff] %v616
        %755 = vst [vmem:[#allocation2 + $0x168] sm:$0xff] %v705
        %756 = vst [vmem:[#allocation2 + $0x170] sm:$0xff] %v619
        %757 = vst [vmem:[#allocation2 + $0x178] sm:$0xff] %v708
        %v758 = vld [vmem:[#allocation2] sm:$0xff]
        %v759 = vld [vmem:[#allocation2 + $0x8] sm:$0xff]
        %v760 = vld [vmem:[#allocation2 + $0x10] sm:$0xff]
        %v761 = vld [vmem:[#allocation2 + $0x18] sm:$0xff]
        %v762 = vld [vmem:[#allocation2 + $0x20] sm:$0xff]
        %v763 = vld [vmem:[#allocation2 + $0x28] sm:$0xff]
        %v764 = vld [vmem:[#allocation2 + $0x30] sm:$0xff]
        %v765 = vld [vmem:[#allocation2 + $0x38] sm:$0xff]
        %v766 = vmax.f32 %v758, 0.0
        %v767 = vmax.f32 %v759, 0.0
        %v768 = vmax.f32 %v760, 0.0
        %v769 = vmax.f32 %v761, 0.0
        %v770 = vmax.f32 %v762, 0.0
        %v771 = vmax.f32 %v763, 0.0
        %v772 = vmax.f32 %v764, 0.0
        %v773 = vmax.f32 %v765, 0.0
        %v774 = vld [vmem:[%s4] sm:$0xf]
        %v775 = vld [vmem:[%s5] sm:$0xf]
        %777 = vset.pattern.permute.xlu0 0
        %778 = vperm.xlu0 %777, %v775
        %v779 = vpop.permute.xlu0 %778
        %vm781 = vcmask 261120
        %v783 = vsel %vm781, %v774, 0
        %785 = vmatpush.msra.mxu0 0.0
        %786 = vmatpush.msra.mxu0 0.0
        %787 = vmatpush.msra.mxu0 0.0
        %788 = vmatpush.msra.mxu0 0.0
        %789 = vmatpush.msra.mxu0 0.0
        %790 = vmatpush.msra.mxu0 0.0
        %791 = vmatpush.msra.mxu0 0.0
        %792 = vmatpush.msra.mxu0 0.0
        %793 = vmatpush.msra.mxu0 0.0
        %794 = vmatpush.msra.mxu0 0.0
        %795 = vmatpush.msra.mxu0 0.0
        %796 = vmatpush.msra.mxu0 0.0
        %797 = vmatpush.msra.mxu0 %v772
        %798 = vmatpush.msra.mxu0 %v770
        %799 = vmatpush.msra.mxu0 %v768
        %800 = vmatpush.msra.mxu0 %v766
        %801 = vmatmul.f32.gmra.mxu0 %v783
        %v802 = vpop.f32.mrf.mxu0
        %v803 = vadd.f32 %v779, %v802
        %804 = vdwg.mxu0
        %805 = vmatpush.msra.mxu0 0.0
        %806 = vmatpush.msra.mxu0 0.0
        %807 = vmatpush.msra.mxu0 0.0
        %808 = vmatpush.msra.mxu0 0.0
        %809 = vmatpush.msra.mxu0 0.0
        %810 = vmatpush.msra.mxu0 0.0
        %811 = vmatpush.msra.mxu0 0.0
        %812 = vmatpush.msra.mxu0 0.0
        %813 = vmatpush.msra.mxu0 0.0
        %814 = vmatpush.msra.mxu0 0.0
        %815 = vmatpush.msra.mxu0 0.0
        %816 = vmatpush.msra.mxu0 0.0
        %817 = vmatpush.msra.mxu0 %v773
        %818 = vmatpush.msra.mxu0 %v771
        %819 = vmatpush.msra.mxu0 %v769
        %820 = vmatpush.msra.mxu0 %v767
        %821 = vmatmul.f32.gmra.mxu0 %v783
        %v822 = vpop.f32.mrf.mxu0
        %v823 = vadd.f32 %v779, %v822
        %824 = vdwg.mxu0
        %v825 = vxor.u32 %v803, 2147483648
        %v826 = vxor.u32 %v823, 2147483648
        %v827 = vmul.f32 %v825, 1.442695
        %v828 = vpow.pop %v827
        %v829 = vmul.f32 %v826, 1.442695
        %v830 = vpow.pop %v829
        %v831 = vadd.f32 %v828, 1.0
        %v832 = vadd.f32 %v830, 1.0
        %v833 = vrcp.pop %v831
        %v834 = vmul.f32 %v831, %v833
        %v835 = vsub.f32 1.0, %v834
        %v836 = vmul.f32 %v833, %v835
        %v837 = vadd.f32 %v833, %v836
        %vm838 = vweird.f32 %v831
        %vm839 = vweird.f32 %v833
        %vm840 = vmor %vm838, %vm839
        %v841 = vsel %vm840, %v833, %v837
        %v842 = vand.u32 2147483647, %v831
        %vm843 = vcmp.eq.f32.partialorder %v842, 8.507059e+37
        %v844 = vand.u32 %v831, 2147483648
        %v845 = vor.u32 1.1754944e-38, %v844
        %v846 = vsel %vm843, %v845, %v841
        %v847 = vmul.f32 1.0, %v846
        %v848 = vrcp.pop %v832
        %v849 = vmul.f32 %v832, %v848
        %v850 = vsub.f32 1.0, %v849
        %v851 = vmul.f32 %v848, %v850
        %v852 = vadd.f32 %v848, %v851
        %vm853 = vweird.f32 %v832
        %vm854 = vweird.f32 %v848
        %vm855 = vmor %vm853, %vm854
        %v856 = vsel %vm855, %v848, %v852
        %v857 = vand.u32 2147483647, %v832
        %vm858 = vcmp.eq.f32.partialorder %v857, 8.507059e+37
        %v859 = vand.u32 %v832, 2147483648
        %v860 = vor.u32 1.1754944e-38, %v859
        %v861 = vsel %vm858, %v860, %v856
        %v862 = vmul.f32 1.0, %v861
        %863 = vst [vmem:[#allocation1] ss:$2 sm:$0xff] %v281
        %v864 = vld.sshfl [vmem:[#allocation1] sm:$0xff pattern:$0x75316420]
        %v865 = vld.sshfl [vmem:[#allocation1 + $0x8] sm:$0xff pattern:$0x75316420]
        %v868 = vadd.f32 %v847, %v864
        %v869 = vadd.f32 %v862, %v865
        %v870 = vmul.f32 %v281, 2.0
        %v871 = vmul.f32 %v870, %v281
        %v872 = vsub.f32 %v871, 1.0
        %873 = vst [vmem:[#allocation3] sm:$0xf] %v868
        %874 = vst [vmem:[#allocation3 + $0x8] sm:$0xf] %v869
        %s875 = scalar_lea.vmem [#allocation1], 1
        %876 = vst [vmem:[%s875] ss:$2 sm:$0xff] %v281
        %v877 = vld.sshfl [vmem:[#allocation1] sm:$0xff pattern:$0x75316420]
        %v878 = vld.sshfl [vmem:[#allocation1 + $0x8] sm:$0xff pattern:$0x75316420]
        %881 = vst [vmem:[#allocation3] sm:$0xf0] %v877
        %882 = vst [vmem:[#allocation3 + $0x8] sm:$0xf0] %v878
        %v883 = vld [vmem:[#allocation2 + $0x40] sm:$0xff]
        %v884 = vld [vmem:[#allocation2 + $0x48] sm:$0xff]
        %v885 = vld [vmem:[#allocation2 + $0x50] sm:$0xff]
        %v886 = vld [vmem:[#allocation2 + $0x58] sm:$0xff]
        %v887 = vld [vmem:[#allocation2 + $0x60] sm:$0xff]
        %v888 = vld [vmem:[#allocation2 + $0x68] sm:$0xff]
        %v889 = vld [vmem:[#allocation2 + $0x70] sm:$0xff]
        %v890 = vld [vmem:[#allocation2 + $0x78] sm:$0xff]
        %s891 = scalar_lea.vmem %s3, 32
        %v892 = vld [vmem:[%s891] sm:$0xff]
        %v893 = vld [vmem:[%s891 + $0x8] sm:$0xff]
        %v894 = vld [vmem:[%s891 + $0x10] sm:$0xff]
        %v895 = vld [vmem:[%s891 + $0x18] sm:$0xff]
        %v896 = vld [vmem:[#allocation3] sm:$0xff]
        %v897 = vld [vmem:[#allocation3 + $0x8] sm:$0xff]
        %vm898 = vcmask 64512
        %v900 = vsel %vm898, %v892, 0
        %v903 = vsel %vm898, %v893, 0
        %v906 = vsel %vm898, %v894, 0
        %v909 = vsel %vm898, %v895, 0
        %911 = vmatpush.msra.mxu0 0.0
        %912 = vmatpush.msra.mxu0 0.0
        %913 = vmatpush.msra.mxu0 0.0
        %914 = vmatpush.msra.mxu0 0.0
        %915 = vmatpush.msra.mxu0 0.0
        %916 = vmatpush.msra.mxu0 0.0
        %917 = vmatpush.msra.mxu0 0.0
        %918 = vmatpush.msra.mxu0 0.0
        %919 = vmatpush.msra.mxu0 0.0
        %920 = vmatpush.msra.mxu0 0.0
        %921 = vmatpush.msra.mxu0 0.0
        %922 = vmatpush.msra.mxu0 0.0
        %923 = vmatpush.msra.mxu0 0.0
        %924 = vmatpush.msra.mxu0 0.0
        %925 = vmatpush.msra.mxu0 0.0
        %926 = vmatpush.msra.mxu0 %v896
        %927 = vmatmul.f32.gmra.mxu0 %v900
        %v928 = vpop.f32.mrf.mxu0
        %v929 = vadd.f32 0.0, %v928
        %930 = vmatmul.f32.gmra.mxu0 %v903
        %v931 = vpop.f32.mrf.mxu0
        %v932 = vadd.f32 0.0, %v931
        %933 = vmatmul.f32.gmra.mxu0 %v906
        %v934 = vpop.f32.mrf.mxu0
        %v935 = vadd.f32 0.0, %v934
        %936 = vmatmul.f32.gmra.mxu0 %v909
        %v937 = vpop.f32.mrf.mxu0
        %v938 = vadd.f32 0.0, %v937
        %939 = vdwg.mxu0
        %940 = vmatpush.msra.mxu0 0.0
        %941 = vmatpush.msra.mxu0 0.0
        %942 = vmatpush.msra.mxu0 0.0
        %943 = vmatpush.msra.mxu0 0.0
        %944 = vmatpush.msra.mxu0 0.0
        %945 = vmatpush.msra.mxu0 0.0
        %946 = vmatpush.msra.mxu0 0.0
        %947 = vmatpush.msra.mxu0 0.0
        %948 = vmatpush.msra.mxu0 0.0
        %949 = vmatpush.msra.mxu0 0.0
        %950 = vmatpush.msra.mxu0 0.0
        %951 = vmatpush.msra.mxu0 0.0
        %952 = vmatpush.msra.mxu0 0.0
        %953 = vmatpush.msra.mxu0 0.0
        %954 = vmatpush.msra.mxu0 0.0
        %955 = vmatpush.msra.mxu0 %v897
        %956 = vmatmul.f32.gmra.mxu0 %v900
        %v957 = vpop.f32.mrf.mxu0
        %v958 = vadd.f32 0.0, %v957
        %959 = vmatmul.f32.gmra.mxu0 %v903
        %v960 = vpop.f32.mrf.mxu0
        %v961 = vadd.f32 0.0, %v960
        %962 = vmatmul.f32.gmra.mxu0 %v906
        %v963 = vpop.f32.mrf.mxu0
        %v964 = vadd.f32 0.0, %v963
        %965 = vmatmul.f32.gmra.mxu0 %v909
        %v966 = vpop.f32.mrf.mxu0
        %v967 = vadd.f32 0.0, %v966
        %968 = vdwg.mxu0
        %v969 = vadd.f32 %v883, %v929
        %v970 = vadd.f32 %v884, %v958
        %v971 = vadd.f32 %v885, %v932
        %v972 = vadd.f32 %v886, %v961
        %v973 = vadd.f32 %v887, %v935
        %v974 = vadd.f32 %v888, %v964
        %v975 = vadd.f32 %v889, %v938
        %v976 = vadd.f32 %v890, %v967
        %v977 = vmax.f32 %v969, 0.0
        %v978 = vmax.f32 %v970, 0.0
        %v979 = vmax.f32 %v971, 0.0
        %v980 = vmax.f32 %v972, 0.0
        %v981 = vmax.f32 %v973, 0.0
        %v982 = vmax.f32 %v974, 0.0
        %v983 = vmax.f32 %v975, 0.0
        %v984 = vmax.f32 %v976, 0.0
        %s985 = scalar_lea.vmem %s4, 4
        %v986 = vld [vmem:[%s985] sm:$0xf]
        %s987 = scalar_lea.vmem %s5, 4
        %v988 = vld [vmem:[%s987] sm:$0xf]
        %990 = vset.pattern.permute.xlu0 0
        %991 = vperm.xlu0 %990, %v988
        %v992 = vpop.permute.xlu0 %991
        %v995 = vsel %vm781, %v986, 0
        %997 = vmatpush.msra.mxu0 0.0
        %998 = vmatpush.msra.mxu0 0.0
        %999 = vmatpush.msra.mxu0 0.0
        %1000 = vmatpush.msra.mxu0 0.0
        %1001 = vmatpush.msra.mxu0 0.0
        %1002 = vmatpush.msra.mxu0 0.0
        %1003 = vmatpush.msra.mxu0 0.0
        %1004 = vmatpush.msra.mxu0 0.0
        %1005 = vmatpush.msra.mxu0 0.0
        %1006 = vmatpush.msra.mxu0 0.0
        %1007 = vmatpush.msra.mxu0 0.0
        %1008 = vmatpush.msra.mxu0 0.0
        %1009 = vmatpush.msra.mxu0 %v983
        %1010 = vmatpush.msra.mxu0 %v981
        %1011 = vmatpush.msra.mxu0 %v979
        %1012 = vmatpush.msra.mxu0 %v977
        %1013 = vmatmul.f32.gmra.mxu0 %v995
        %v1014 = vpop.f32.mrf.mxu0
        %v1015 = vadd.f32 %v992, %v1014
        %1016 = vdwg.mxu0
        %1017 = vmatpush.msra.mxu0 0.0
        %1018 = vmatpush.msra.mxu0 0.0
        %1019 = vmatpush.msra.mxu0 0.0
        %1020 = vmatpush.msra.mxu0 0.0
        %1021 = vmatpush.msra.mxu0 0.0
        %1022 = vmatpush.msra.mxu0 0.0
        %1023 = vmatpush.msra.mxu0 0.0
        %1024 = vmatpush.msra.mxu0 0.0
        %1025 = vmatpush.msra.mxu0 0.0
        %1026 = vmatpush.msra.mxu0 0.0
        %1027 = vmatpush.msra.mxu0 0.0
        %1028 = vmatpush.msra.mxu0 0.0
        %1029 = vmatpush.msra.mxu0 %v984
        %1030 = vmatpush.msra.mxu0 %v982
        %1031 = vmatpush.msra.mxu0 %v980
        %1032 = vmatpush.msra.mxu0 %v978
        %1033 = vmatmul.f32.gmra.mxu0 %v995
        %v1034 = vpop.f32.mrf.mxu0
        %v1035 = vadd.f32 %v992, %v1034
        %1036 = vdwg.mxu0
        %v1037 = vxor.u32 %v1015, 2147483648
        %v1038 = vxor.u32 %v1035, 2147483648
        %v1039 = vmul.f32 %v1037, 1.442695
        %v1040 = vpow.pop %v1039
        %v1041 = vmul.f32 %v1038, 1.442695
        %v1042 = vpow.pop %v1041
        %v1043 = vadd.f32 %v1040, 1.0
        %v1044 = vadd.f32 %v1042, 1.0
        %v1045 = vrcp.pop %v1043
        %v1046 = vmul.f32 %v1043, %v1045
        %v1047 = vsub.f32 1.0, %v1046
        %v1048 = vmul.f32 %v1045, %v1047
        %v1049 = vadd.f32 %v1045, %v1048
        %vm1050 = vweird.f32 %v1043
        %vm1051 = vweird.f32 %v1045
        %vm1052 = vmor %vm1050, %vm1051
        %v1053 = vsel %vm1052, %v1045, %v1049
        %v1054 = vand.u32 2147483647, %v1043
        %vm1055 = vcmp.eq.f32.partialorder %v1054, 8.507059e+37
        %v1056 = vand.u32 %v1043, 2147483648
        %v1057 = vor.u32 1.1754944e-38, %v1056
        %v1058 = vsel %vm1055, %v1057, %v1053
        %v1059 = vmul.f32 1.0, %v1058
        %v1060 = vrcp.pop %v1044
        %v1061 = vmul.f32 %v1044, %v1060
        %v1062 = vsub.f32 1.0, %v1061
        %v1063 = vmul.f32 %v1060, %v1062
        %v1064 = vadd.f32 %v1060, %v1063
        %vm1065 = vweird.f32 %v1044
        %vm1066 = vweird.f32 %v1060
        %vm1067 = vmor %vm1065, %vm1066
        %v1068 = vsel %vm1067, %v1060, %v1064
        %v1069 = vand.u32 2147483647, %v1044
        %vm1070 = vcmp.eq.f32.partialorder %v1069, 8.507059e+37
        %v1071 = vand.u32 %v1044, 2147483648
        %v1072 = vor.u32 1.1754944e-38, %v1071
        %v1073 = vsel %vm1070, %v1072, %v1068
        %v1074 = vmul.f32 1.0, %v1073
        %1075 = vst [vmem:[#allocation1] ss:$2 sm:$0xff] %v281
        %v1076 = vld.sshfl [vmem:[#allocation1] sm:$0xff pattern:$0x75316420]
        %v1077 = vld.sshfl [vmem:[#allocation1 + $0x8] sm:$0xff pattern:$0x75316420]
        %v1080 = vmul.f32 %v1059, %v1076
        %v1081 = vmul.f32 %v1074, %v1077
        %v1082 = vadd.f32 %v1080, %v868
        %v1083 = vadd.f32 %v1081, %v869
        %v1084 = vmul.f32 %v870, %v872
        %v1085 = vsub.f32 %v1084, %v281
        %1086 = vst [vmem:[#allocation3] sm:$0xf] %v1082
        %1087 = vst [vmem:[#allocation3 + $0x8] sm:$0xf] %v1083
        %s1089 = scalar_lea.vmem [#allocation1], 1
        %1090 = vst [vmem:[%s1089] ss:$2 sm:$0xff] %v872
        %v1091 = vld.sshfl [vmem:[#allocation1] sm:$0xff pattern:$0x75316420]
        %v1092 = vld.sshfl [vmem:[#allocation1 + $0x8] sm:$0xff pattern:$0x75316420]
        %1095 = vst [vmem:[#allocation3] sm:$0xf0] %v1091
        %1096 = vst [vmem:[#allocation3 + $0x8] sm:$0xf0] %v1092
        %v1097 = vld [vmem:[#allocation2 + $0x80] sm:$0xff]
        %v1098 = vld [vmem:[#allocation2 + $0x88] sm:$0xff]
        %v1099 = vld [vmem:[#allocation2 + $0x90] sm:$0xff]
        %v1100 = vld [vmem:[#allocation2 + $0x98] sm:$0xff]
        %v1101 = vld [vmem:[#allocation2 + $0xa0] sm:$0xff]
        %v1102 = vld [vmem:[#allocation2 + $0xa8] sm:$0xff]
        %v1103 = vld [vmem:[#allocation2 + $0xb0] sm:$0xff]
        %v1104 = vld [vmem:[#allocation2 + $0xb8] sm:$0xff]
        %s1105 = scalar_lea.vmem %s3, 64
        %v1106 = vld [vmem:[%s1105] sm:$0xff]
        %v1107 = vld [vmem:[%s1105 + $0x8] sm:$0xff]
        %v1108 = vld [vmem:[%s1105 + $0x10] sm:$0xff]
        %v1109 = vld [vmem:[%s1105 + $0x18] sm:$0xff]
        %v1110 = vld [vmem:[#allocation3] sm:$0xff]
        %v1111 = vld [vmem:[#allocation3 + $0x8] sm:$0xff]
        %v1113 = vsel %vm898, %v1106, 0
        %v1116 = vsel %vm898, %v1107, 0
        %v1119 = vsel %vm898, %v1108, 0
        %v1122 = vsel %vm898, %v1109, 0
        %1124 = vmatpush.msra.mxu0 0.0
        %1125 = vmatpush.msra.mxu0 0.0
        %1126 = vmatpush.msra.mxu0 0.0
        %1127 = vmatpush.msra.mxu0 0.0
        %1128 = vmatpush.msra.mxu0 0.0
        %1129 = vmatpush.msra.mxu0 0.0
        %1130 = vmatpush.msra.mxu0 0.0
        %1131 = vmatpush.msra.mxu0 0.0
        %1132 = vmatpush.msra.mxu0 0.0
        %1133 = vmatpush.msra.mxu0 0.0
        %1134 = vmatpush.msra.mxu0 0.0
        %1135 = vmatpush.msra.mxu0 0.0
        %1136 = vmatpush.msra.mxu0 0.0
        %1137 = vmatpush.msra.mxu0 0.0
        %1138 = vmatpush.msra.mxu0 0.0
        %1139 = vmatpush.msra.mxu0 %v1110
        %1140 = vmatmul.f32.gmra.mxu0 %v1113
        %v1141 = vpop.f32.mrf.mxu0
        %v1142 = vadd.f32 0.0, %v1141
        %1143 = vmatmul.f32.gmra.mxu0 %v1116
        %v1144 = vpop.f32.mrf.mxu0
        %v1145 = vadd.f32 0.0, %v1144
        %1146 = vmatmul.f32.gmra.mxu0 %v1119
        %v1147 = vpop.f32.mrf.mxu0
        %v1148 = vadd.f32 0.0, %v1147
        %1149 = vmatmul.f32.gmra.mxu0 %v1122
        %v1150 = vpop.f32.mrf.mxu0
        %v1151 = vadd.f32 0.0, %v1150
        %1152 = vdwg.mxu0
        %1153 = vmatpush.msra.mxu0 0.0
        %1154 = vmatpush.msra.mxu0 0.0
        %1155 = vmatpush.msra.mxu0 0.0
        %1156 = vmatpush.msra.mxu0 0.0
        %1157 = vmatpush.msra.mxu0 0.0
        %1158 = vmatpush.msra.mxu0 0.0
        %1159 = vmatpush.msra.mxu0 0.0
        %1160 = vmatpush.msra.mxu0 0.0
        %1161 = vmatpush.msra.mxu0 0.0
        %1162 = vmatpush.msra.mxu0 0.0
        %1163 = vmatpush.msra.mxu0 0.0
        %1164 = vmatpush.msra.mxu0 0.0
        %1165 = vmatpush.msra.mxu0 0.0
        %1166 = vmatpush.msra.mxu0 0.0
        %1167 = vmatpush.msra.mxu0 0.0
        %1168 = vmatpush.msra.mxu0 %v1111
        %1169 = vmatmul.f32.gmra.mxu0 %v1113
        %v1170 = vpop.f32.mrf.mxu0
        %v1171 = vadd.f32 0.0, %v1170
        %1172 = vmatmul.f32.gmra.mxu0 %v1116
        %v1173 = vpop.f32.mrf.mxu0
        %v1174 = vadd.f32 0.0, %v1173
        %1175 = vmatmul.f32.gmra.mxu0 %v1119
        %v1176 = vpop.f32.mrf.mxu0
        %v1177 = vadd.f32 0.0, %v1176
        %1178 = vmatmul.f32.gmra.mxu0 %v1122
        %v1179 = vpop.f32.mrf.mxu0
        %v1180 = vadd.f32 0.0, %v1179
        %1181 = vdwg.mxu0
        %v1182 = vadd.f32 %v1097, %v1142
        %v1183 = vadd.f32 %v1098, %v1171
        %v1184 = vadd.f32 %v1099, %v1145
        %v1185 = vadd.f32 %v1100, %v1174
        %v1186 = vadd.f32 %v1101, %v1148
        %v1187 = vadd.f32 %v1102, %v1177
        %v1188 = vadd.f32 %v1103, %v1151
        %v1189 = vadd.f32 %v1104, %v1180
        %v1190 = vmax.f32 %v1182, 0.0
        %v1191 = vmax.f32 %v1183, 0.0
        %v1192 = vmax.f32 %v1184, 0.0
        %v1193 = vmax.f32 %v1185, 0.0
        %v1194 = vmax.f32 %v1186, 0.0
        %v1195 = vmax.f32 %v1187, 0.0
        %v1196 = vmax.f32 %v1188, 0.0
        %v1197 = vmax.f32 %v1189, 0.0
        %s1198 = scalar_lea.vmem %s4, 8
        %v1199 = vld [vmem:[%s1198] sm:$0xf]
        %s1200 = scalar_lea.vmem %s5, 8
        %v1201 = vld [vmem:[%s1200] sm:$0xf]
        %1203 = vset.pattern.permute.xlu0 0
        %1204 = vperm.xlu0 %1203, %v1201
        %v1205 = vpop.permute.xlu0 %1204
        %v1208 = vsel %vm781, %v1199, 0
        %1210 = vmatpush.msra.mxu0 0.0
        %1211 = vmatpush.msra.mxu0 0.0
        %1212 = vmatpush.msra.mxu0 0.0
        %1213 = vmatpush.msra.mxu0 0.0
        %1214 = vmatpush.msra.mxu0 0.0
        %1215 = vmatpush.msra.mxu0 0.0
        %1216 = vmatpush.msra.mxu0 0.0
        %1217 = vmatpush.msra.mxu0 0.0
        %1218 = vmatpush.msra.mxu0 0.0
        %1219 = vmatpush.msra.mxu0 0.0
        %1220 = vmatpush.msra.mxu0 0.0
        %1221 = vmatpush.msra.mxu0 0.0
        %1222 = vmatpush.msra.mxu0 %v1196
        %1223 = vmatpush.msra.mxu0 %v1194
        %1224 = vmatpush.msra.mxu0 %v1192
        %1225 = vmatpush.msra.mxu0 %v1190
        %1226 = vmatmul.f32.gmra.mxu0 %v1208
        %v1227 = vpop.f32.mrf.mxu0
        %v1228 = vadd.f32 %v1205, %v1227
        %1229 = vdwg.mxu0
        %1230 = vmatpush.msra.mxu0 0.0
        %1231 = vmatpush.msra.mxu0 0.0
        %1232 = vmatpush.msra.mxu0 0.0
        %1233 = vmatpush.msra.mxu0 0.0
        %1234 = vmatpush.msra.mxu0 0.0
        %1235 = vmatpush.msra.mxu0 0.0
        %1236 = vmatpush.msra.mxu0 0.0
        %1237 = vmatpush.msra.mxu0 0.0
        %1238 = vmatpush.msra.mxu0 0.0
        %1239 = vmatpush.msra.mxu0 0.0
        %1240 = vmatpush.msra.mxu0 0.0
        %1241 = vmatpush.msra.mxu0 0.0
        %1242 = vmatpush.msra.mxu0 %v1197
        %1243 = vmatpush.msra.mxu0 %v1195
        %1244 = vmatpush.msra.mxu0 %v1193
        %1245 = vmatpush.msra.mxu0 %v1191
        %1246 = vmatmul.f32.gmra.mxu0 %v1208
        %v1247 = vpop.f32.mrf.mxu0
        %v1248 = vadd.f32 %v1205, %v1247
        %1249 = vdwg.mxu0
        %v1250 = vxor.u32 %v1228, 2147483648
        %v1251 = vxor.u32 %v1248, 2147483648
        %v1252 = vmul.f32 %v1250, 1.442695
        %v1253 = vpow.pop %v1252
        %v1254 = vmul.f32 %v1251, 1.442695
        %v1255 = vpow.pop %v1254
        %v1256 = vadd.f32 %v1253, 1.0
        %v1257 = vadd.f32 %v1255, 1.0
        %v1258 = vrcp.pop %v1256
        %v1259 = vmul.f32 %v1256, %v1258
        %v1260 = vsub.f32 1.0, %v1259
        %v1261 = vmul.f32 %v1258, %v1260
        %v1262 = vadd.f32 %v1258, %v1261
        %vm1263 = vweird.f32 %v1256
        %vm1264 = vweird.f32 %v1258
        %vm1265 = vmor %vm1263, %vm1264
        %v1266 = vsel %vm1265, %v1258, %v1262
        %v1267 = vand.u32 2147483647, %v1256
        %vm1268 = vcmp.eq.f32.partialorder %v1267, 8.507059e+37
        %v1269 = vand.u32 %v1256, 2147483648
        %v1270 = vor.u32 1.1754944e-38, %v1269
        %v1271 = vsel %vm1268, %v1270, %v1266
        %v1272 = vmul.f32 1.0, %v1271
        %v1273 = vrcp.pop %v1257
        %v1274 = vmul.f32 %v1257, %v1273
        %v1275 = vsub.f32 1.0, %v1274
        %v1276 = vmul.f32 %v1273, %v1275
        %v1277 = vadd.f32 %v1273, %v1276
        %vm1278 = vweird.f32 %v1257
        %vm1279 = vweird.f32 %v1273
        %vm1280 = vmor %vm1278, %vm1279
        %v1281 = vsel %vm1280, %v1273, %v1277
        %v1282 = vand.u32 2147483647, %v1257
        %vm1283 = vcmp.eq.f32.partialorder %v1282, 8.507059e+37
        %v1284 = vand.u32 %v1257, 2147483648
        %v1285 = vor.u32 1.1754944e-38, %v1284
        %v1286 = vsel %vm1283, %v1285, %v1281
        %v1287 = vmul.f32 1.0, %v1286
        %1288 = vst [vmem:[#allocation1] ss:$2 sm:$0xff] %v872
        %v1289 = vld.sshfl [vmem:[#allocation1] sm:$0xff pattern:$0x75316420]
        %v1290 = vld.sshfl [vmem:[#allocation1 + $0x8] sm:$0xff pattern:$0x75316420]
        %v1293 = vmul.f32 %v1272, %v1289
        %v1294 = vmul.f32 %v1287, %v1290
        %v1295 = vadd.f32 %v1293, %v1082
        %v1296 = vadd.f32 %v1294, %v1083
        %v1297 = vmul.f32 %v870, %v1085
        %v1298 = vsub.f32 %v1297, %v872
        %1299 = vst [vmem:[#allocation3] sm:$0xf] %v1295
        %1300 = vst [vmem:[#allocation3 + $0x8] sm:$0xf] %v1296
        %s1302 = scalar_lea.vmem [#allocation1], 1
        %1303 = vst [vmem:[%s1302] ss:$2 sm:$0xff] %v1085
        %v1304 = vld.sshfl [vmem:[#allocation1] sm:$0xff pattern:$0x75316420]
        %v1305 = vld.sshfl [vmem:[#allocation1 + $0x8] sm:$0xff pattern:$0x75316420]
        %1308 = vst [vmem:[#allocation3] sm:$0xf0] %v1304
        %1309 = vst [vmem:[#allocation3 + $0x8] sm:$0xf0] %v1305
        %v1310 = vld [vmem:[#allocation2 + $0xc0] sm:$0xff]
        %v1311 = vld [vmem:[#allocation2 + $0xc8] sm:$0xff]
        %v1312 = vld [vmem:[#allocation2 + $0xd0] sm:$0xff]
        %v1313 = vld [vmem:[#allocation2 + $0xd8] sm:$0xff]
        %v1314 = vld [vmem:[#allocation2 + $0xe0] sm:$0xff]
        %v1315 = vld [vmem:[#allocation2 + $0xe8] sm:$0xff]
        %v1316 = vld [vmem:[#allocation2 + $0xf0] sm:$0xff]
        %v1317 = vld [vmem:[#allocation2 + $0xf8] sm:$0xff]
        %s1318 = scalar_lea.vmem %s3, 96
        %v1319 = vld [vmem:[%s1318] sm:$0xff]
        %v1320 = vld [vmem:[%s1318 + $0x8] sm:$0xff]
        %v1321 = vld [vmem:[%s1318 + $0x10] sm:$0xff]
        %v1322 = vld [vmem:[%s1318 + $0x18] sm:$0xff]
        %v1323 = vld [vmem:[#allocation3] sm:$0xff]
        %v1324 = vld [vmem:[#allocation3 + $0x8] sm:$0xff]
        %v1326 = vsel %vm898, %v1319, 0
        %v1329 = vsel %vm898, %v1320, 0
        %v1332 = vsel %vm898, %v1321, 0
        %v1335 = vsel %vm898, %v1322, 0
        %1337 = vmatpush.msra.mxu0 0.0
        %1338 = vmatpush.msra.mxu0 0.0
        %1339 = vmatpush.msra.mxu0 0.0
        %1340 = vmatpush.msra.mxu0 0.0
        %1341 = vmatpush.msra.mxu0 0.0
        %1342 = vmatpush.msra.mxu0 0.0
        %1343 = vmatpush.msra.mxu0 0.0
        %1344 = vmatpush.msra.mxu0 0.0
        %1345 = vmatpush.msra.mxu0 0.0
        %1346 = vmatpush.msra.mxu0 0.0
        %1347 = vmatpush.msra.mxu0 0.0
        %1348 = vmatpush.msra.mxu0 0.0
        %1349 = vmatpush.msra.mxu0 0.0
        %1350 = vmatpush.msra.mxu0 0.0
        %1351 = vmatpush.msra.mxu0 0.0
        %1352 = vmatpush.msra.mxu0 %v1323
        %1353 = vmatmul.f32.gmra.mxu0 %v1326
        %v1354 = vpop.f32.mrf.mxu0
        %v1355 = vadd.f32 0.0, %v1354
        %1356 = vmatmul.f32.gmra.mxu0 %v1329
        %v1357 = vpop.f32.mrf.mxu0
        %v1358 = vadd.f32 0.0, %v1357
        %1359 = vmatmul.f32.gmra.mxu0 %v1332
        %v1360 = vpop.f32.mrf.mxu0
        %v1361 = vadd.f32 0.0, %v1360
        %1362 = vmatmul.f32.gmra.mxu0 %v1335
        %v1363 = vpop.f32.mrf.mxu0
        %v1364 = vadd.f32 0.0, %v1363
        %1365 = vdwg.mxu0
        %1366 = vmatpush.msra.mxu0 0.0
        %1367 = vmatpush.msra.mxu0 0.0
        %1368 = vmatpush.msra.mxu0 0.0
        %1369 = vmatpush.msra.mxu0 0.0
        %1370 = vmatpush.msra.mxu0 0.0
        %1371 = vmatpush.msra.mxu0 0.0
        %1372 = vmatpush.msra.mxu0 0.0
        %1373 = vmatpush.msra.mxu0 0.0
        %1374 = vmatpush.msra.mxu0 0.0
        %1375 = vmatpush.msra.mxu0 0.0
        %1376 = vmatpush.msra.mxu0 0.0
        %1377 = vmatpush.msra.mxu0 0.0
        %1378 = vmatpush.msra.mxu0 0.0
        %1379 = vmatpush.msra.mxu0 0.0
        %1380 = vmatpush.msra.mxu0 0.0
        %1381 = vmatpush.msra.mxu0 %v1324
        %1382 = vmatmul.f32.gmra.mxu0 %v1326
        %v1383 = vpop.f32.mrf.mxu0
        %v1384 = vadd.f32 0.0, %v1383
        %1385 = vmatmul.f32.gmra.mxu0 %v1329
        %v1386 = vpop.f32.mrf.mxu0
        %v1387 = vadd.f32 0.0, %v1386
        %1388 = vmatmul.f32.gmra.mxu0 %v1332
        %v1389 = vpop.f32.mrf.mxu0
        %v1390 = vadd.f32 0.0, %v1389
        %1391 = vmatmul.f32.gmra.mxu0 %v1335
        %v1392 = vpop.f32.mrf.mxu0
        %v1393 = vadd.f32 0.0, %v1392
        %1394 = vdwg.mxu0
        %v1395 = vadd.f32 %v1310, %v1355
        %v1396 = vadd.f32 %v1311, %v1384
        %v1397 = vadd.f32 %v1312, %v1358
        %v1398 = vadd.f32 %v1313, %v1387
        %v1399 = vadd.f32 %v1314, %v1361
        %v1400 = vadd.f32 %v1315, %v1390
        %v1401 = vadd.f32 %v1316, %v1364
        %v1402 = vadd.f32 %v1317, %v1393
        %v1403 = vmax.f32 %v1395, 0.0
        %v1404 = vmax.f32 %v1396, 0.0
        %v1405 = vmax.f32 %v1397, 0.0
        %v1406 = vmax.f32 %v1398, 0.0
        %v1407 = vmax.f32 %v1399, 0.0
        %v1408 = vmax.f32 %v1400, 0.0
        %v1409 = vmax.f32 %v1401, 0.0
        %v1410 = vmax.f32 %v1402, 0.0
        %s1411 = scalar_lea.vmem %s4, 12
        %v1412 = vld [vmem:[%s1411] sm:$0xf]
        %s1413 = scalar_lea.vmem %s5, 12
        %v1414 = vld [vmem:[%s1413] sm:$0xf]
        %1416 = vset.pattern.permute.xlu0 0
        %1417 = vperm.xlu0 %1416, %v1414
        %v1418 = vpop.permute.xlu0 %1417
        %v1421 = vsel %vm781, %v1412, 0
        %1423 = vmatpush.msra.mxu0 0.0
        %1424 = vmatpush.msra.mxu0 0.0
        %1425 = vmatpush.msra.mxu0 0.0
        %1426 = vmatpush.msra.mxu0 0.0
        %1427 = vmatpush.msra.mxu0 0.0
        %1428 = vmatpush.msra.mxu0 0.0
        %1429 = vmatpush.msra.mxu0 0.0
        %1430 = vmatpush.msra.mxu0 0.0
        %1431 = vmatpush.msra.mxu0 0.0
        %1432 = vmatpush.msra.mxu0 0.0
        %1433 = vmatpush.msra.mxu0 0.0
        %1434 = vmatpush.msra.mxu0 0.0
        %1435 = vmatpush.msra.mxu0 %v1409
        %1436 = vmatpush.msra.mxu0 %v1407
        %1437 = vmatpush.msra.mxu0 %v1405
        %1438 = vmatpush.msra.mxu0 %v1403
        %1439 = vmatmul.f32.gmra.mxu0 %v1421
        %v1440 = vpop.f32.mrf.mxu0
        %v1441 = vadd.f32 %v1418, %v1440
        %1442 = vdwg.mxu0
        %1443 = vmatpush.msra.mxu0 0.0
        %1444 = vmatpush.msra.mxu0 0.0
        %1445 = vmatpush.msra.mxu0 0.0
        %1446 = vmatpush.msra.mxu0 0.0
        %1447 = vmatpush.msra.mxu0 0.0
        %1448 = vmatpush.msra.mxu0 0.0
        %1449 = vmatpush.msra.mxu0 0.0
        %1450 = vmatpush.msra.mxu0 0.0
        %1451 = vmatpush.msra.mxu0 0.0
        %1452 = vmatpush.msra.mxu0 0.0
        %1453 = vmatpush.msra.mxu0 0.0
        %1454 = vmatpush.msra.mxu0 0.0
        %1455 = vmatpush.msra.mxu0 %v1410
        %1456 = vmatpush.msra.mxu0 %v1408
        %1457 = vmatpush.msra.mxu0 %v1406
        %1458 = vmatpush.msra.mxu0 %v1404
        %1459 = vmatmul.f32.gmra.mxu0 %v1421
        %v1460 = vpop.f32.mrf.mxu0
        %v1461 = vadd.f32 %v1418, %v1460
        %1462 = vdwg.mxu0
        %v1463 = vxor.u32 %v1441, 2147483648
        %v1464 = vxor.u32 %v1461, 2147483648
        %v1465 = vmul.f32 %v1463, 1.442695
        %v1466 = vpow.pop %v1465
        %v1467 = vmul.f32 %v1464, 1.442695
        %v1468 = vpow.pop %v1467
        %v1469 = vadd.f32 %v1466, 1.0
        %v1470 = vadd.f32 %v1468, 1.0
        %v1471 = vrcp.pop %v1469
        %v1472 = vmul.f32 %v1469, %v1471
        %v1473 = vsub.f32 1.0, %v1472
        %v1474 = vmul.f32 %v1471, %v1473
        %v1475 = vadd.f32 %v1471, %v1474
        %vm1476 = vweird.f32 %v1469
        %vm1477 = vweird.f32 %v1471
        %vm1478 = vmor %vm1476, %vm1477
        %v1479 = vsel %vm1478, %v1471, %v1475
        %v1480 = vand.u32 2147483647, %v1469
        %vm1481 = vcmp.eq.f32.partialorder %v1480, 8.507059e+37
        %v1482 = vand.u32 %v1469, 2147483648
        %v1483 = vor.u32 1.1754944e-38, %v1482
        %v1484 = vsel %vm1481, %v1483, %v1479
        %v1485 = vmul.f32 1.0, %v1484
        %v1486 = vrcp.pop %v1470
        %v1487 = vmul.f32 %v1470, %v1486
        %v1488 = vsub.f32 1.0, %v1487
        %v1489 = vmul.f32 %v1486, %v1488
        %v1490 = vadd.f32 %v1486, %v1489
        %vm1491 = vweird.f32 %v1470
        %vm1492 = vweird.f32 %v1486
        %vm1493 = vmor %vm1491, %vm1492
        %v1494 = vsel %vm1493, %v1486, %v1490
        %v1495 = vand.u32 2147483647, %v1470
        %vm1496 = vcmp.eq.f32.partialorder %v1495, 8.507059e+37
        %v1497 = vand.u32 %v1470, 2147483648
        %v1498 = vor.u32 1.1754944e-38, %v1497
        %v1499 = vsel %vm1496, %v1498, %v1494
        %v1500 = vmul.f32 1.0, %v1499
        %1501 = vst [vmem:[#allocation1] ss:$2 sm:$0xff] %v1085
        %v1502 = vld.sshfl [vmem:[#allocation1] sm:$0xff pattern:$0x75316420]
        %v1503 = vld.sshfl [vmem:[#allocation1 + $0x8] sm:$0xff pattern:$0x75316420]
        %v1506 = vmul.f32 %v1485, %v1502
        %v1507 = vmul.f32 %v1500, %v1503
        %v1508 = vadd.f32 %v1506, %v1295
        %v1509 = vadd.f32 %v1507, %v1296
        %v1510 = vmul.f32 %v870, %v1298
        %v1511 = vsub.f32 %v1510, %v1085
        %1512 = vst [vmem:[#allocation3] sm:$0xf] %v1508
        %1513 = vst [vmem:[#allocation3 + $0x8] sm:$0xf] %v1509
        %s1515 = scalar_lea.vmem [#allocation1], 1
        %1516 = vst [vmem:[%s1515] ss:$2 sm:$0xff] %v1298
        %v1517 = vld.sshfl [vmem:[#allocation1] sm:$0xff pattern:$0x75316420]
        %v1518 = vld.sshfl [vmem:[#allocation1 + $0x8] sm:$0xff pattern:$0x75316420]
        %1521 = vst [vmem:[#allocation3] sm:$0xf0] %v1517
        %1522 = vst [vmem:[#allocation3 + $0x8] sm:$0xf0] %v1518
        %v1523 = vld [vmem:[#allocation2 + $0x100] sm:$0xff]
        %v1524 = vld [vmem:[#allocation2 + $0x108] sm:$0xff]
        %v1525 = vld [vmem:[#allocation2 + $0x110] sm:$0xff]
        %v1526 = vld [vmem:[#allocation2 + $0x118] sm:$0xff]
        %v1527 = vld [vmem:[#allocation2 + $0x120] sm:$0xff]
        %v1528 = vld [vmem:[#allocation2 + $0x128] sm:$0xff]
        %v1529 = vld [vmem:[#allocation2 + $0x130] sm:$0xff]
        %v1530 = vld [vmem:[#allocation2 + $0x138] sm:$0xff]
        %s1531 = scalar_lea.vmem %s3, 128
        %v1532 = vld [vmem:[%s1531] sm:$0xff]
        %v1533 = vld [vmem:[%s1531 + $0x8] sm:$0xff]
        %v1534 = vld [vmem:[%s1531 + $0x10] sm:$0xff]
        %v1535 = vld [vmem:[%s1531 + $0x18] sm:$0xff]
        %v1536 = vld [vmem:[#allocation3] sm:$0xff]
        %v1537 = vld [vmem:[#allocation3 + $0x8] sm:$0xff]
        %v1539 = vsel %vm898, %v1532, 0
        %v1542 = vsel %vm898, %v1533, 0
        %v1545 = vsel %vm898, %v1534, 0
        %v1548 = vsel %vm898, %v1535, 0
        %1550 = vmatpush.msra.mxu0 0.0
        %1551 = vmatpush.msra.mxu0 0.0
        %1552 = vmatpush.msra.mxu0 0.0
        %1553 = vmatpush.msra.mxu0 0.0
        %1554 = vmatpush.msra.mxu0 0.0
        %1555 = vmatpush.msra.mxu0 0.0
        %1556 = vmatpush.msra.mxu0 0.0
        %1557 = vmatpush.msra.mxu0 0.0
        %1558 = vmatpush.msra.mxu0 0.0
        %1559 = vmatpush.msra.mxu0 0.0
        %1560 = vmatpush.msra.mxu0 0.0
        %1561 = vmatpush.msra.mxu0 0.0
        %1562 = vmatpush.msra.mxu0 0.0
        %1563 = vmatpush.msra.mxu0 0.0
        %1564 = vmatpush.msra.mxu0 0.0
        %1565 = vmatpush.msra.mxu0 %v1536
        %1566 = vmatmul.f32.gmra.mxu0 %v1539
        %v1567 = vpop.f32.mrf.mxu0
        %v1568 = vadd.f32 0.0, %v1567
        %1569 = vmatmul.f32.gmra.mxu0 %v1542
        %v1570 = vpop.f32.mrf.mxu0
        %v1571 = vadd.f32 0.0, %v1570
        %1572 = vmatmul.f32.gmra.mxu0 %v1545
        %v1573 = vpop.f32.mrf.mxu0
        %v1574 = vadd.f32 0.0, %v1573
        %1575 = vmatmul.f32.gmra.mxu0 %v1548
        %v1576 = vpop.f32.mrf.mxu0
        %v1577 = vadd.f32 0.0, %v1576
        %1578 = vdwg.mxu0
        %1579 = vmatpush.msra.mxu0 0.0
        %1580 = vmatpush.msra.mxu0 0.0
        %1581 = vmatpush.msra.mxu0 0.0
        %1582 = vmatpush.msra.mxu0 0.0
        %1583 = vmatpush.msra.mxu0 0.0
        %1584 = vmatpush.msra.mxu0 0.0
        %1585 = vmatpush.msra.mxu0 0.0
        %1586 = vmatpush.msra.mxu0 0.0
        %1587 = vmatpush.msra.mxu0 0.0
        %1588 = vmatpush.msra.mxu0 0.0
        %1589 = vmatpush.msra.mxu0 0.0
        %1590 = vmatpush.msra.mxu0 0.0
        %1591 = vmatpush.msra.mxu0 0.0
        %1592 = vmatpush.msra.mxu0 0.0
        %1593 = vmatpush.msra.mxu0 0.0
        %1594 = vmatpush.msra.mxu0 %v1537
        %1595 = vmatmul.f32.gmra.mxu0 %v1539
        %v1596 = vpop.f32.mrf.mxu0
        %v1597 = vadd.f32 0.0, %v1596
        %1598 = vmatmul.f32.gmra.mxu0 %v1542
        %v1599 = vpop.f32.mrf.mxu0
        %v1600 = vadd.f32 0.0, %v1599
        %1601 = vmatmul.f32.gmra.mxu0 %v1545
        %v1602 = vpop.f32.mrf.mxu0
        %v1603 = vadd.f32 0.0, %v1602
        %1604 = vmatmul.f32.gmra.mxu0 %v1548
        %v1605 = vpop.f32.mrf.mxu0
        %v1606 = vadd.f32 0.0, %v1605
        %1607 = vdwg.mxu0
        %v1608 = vadd.f32 %v1523, %v1568
        %v1609 = vadd.f32 %v1524, %v1597
        %v1610 = vadd.f32 %v1525, %v1571
        %v1611 = vadd.f32 %v1526, %v1600
        %v1612 = vadd.f32 %v1527, %v1574
        %v1613 = vadd.f32 %v1528, %v1603
        %v1614 = vadd.f32 %v1529, %v1577
        %v1615 = vadd.f32 %v1530, %v1606
        %v1616 = vmax.f32 %v1608, 0.0
        %v1617 = vmax.f32 %v1609, 0.0
        %v1618 = vmax.f32 %v1610, 0.0
        %v1619 = vmax.f32 %v1611, 0.0
        %v1620 = vmax.f32 %v1612, 0.0
        %v1621 = vmax.f32 %v1613, 0.0
        %v1622 = vmax.f32 %v1614, 0.0
        %v1623 = vmax.f32 %v1615, 0.0
        %s1624 = scalar_lea.vmem %s4, 16
        %v1625 = vld [vmem:[%s1624] sm:$0xf]
        %s1626 = scalar_lea.vmem %s5, 16
        %v1627 = vld [vmem:[%s1626] sm:$0xf]
        %1629 = vset.pattern.permute.xlu0 0
        %1630 = vperm.xlu0 %1629, %v1627
        %v1631 = vpop.permute.xlu0 %1630
        %v1634 = vsel %vm781, %v1625, 0
        %1636 = vmatpush.msra.mxu0 0.0
        %1637 = vmatpush.msra.mxu0 0.0
        %1638 = vmatpush.msra.mxu0 0.0
        %1639 = vmatpush.msra.mxu0 0.0
        %1640 = vmatpush.msra.mxu0 0.0
        %1641 = vmatpush.msra.mxu0 0.0
        %1642 = vmatpush.msra.mxu0 0.0
        %1643 = vmatpush.msra.mxu0 0.0
        %1644 = vmatpush.msra.mxu0 0.0
        %1645 = vmatpush.msra.mxu0 0.0
        %1646 = vmatpush.msra.mxu0 0.0
        %1647 = vmatpush.msra.mxu0 0.0
        %1648 = vmatpush.msra.mxu0 %v1622
        %1649 = vmatpush.msra.mxu0 %v1620
        %1650 = vmatpush.msra.mxu0 %v1618
        %1651 = vmatpush.msra.mxu0 %v1616
        %1652 = vmatmul.f32.gmra.mxu0 %v1634
        %v1653 = vpop.f32.mrf.mxu0
        %v1654 = vadd.f32 %v1631, %v1653
        %1655 = vdwg.mxu0
        %1656 = vmatpush.msra.mxu0 0.0
        %1657 = vmatpush.msra.mxu0 0.0
        %1658 = vmatpush.msra.mxu0 0.0
        %1659 = vmatpush.msra.mxu0 0.0
        %1660 = vmatpush.msra.mxu0 0.0
        %1661 = vmatpush.msra.mxu0 0.0
        %1662 = vmatpush.msra.mxu0 0.0
        %1663 = vmatpush.msra.mxu0 0.0
        %1664 = vmatpush.msra.mxu0 0.0
        %1665 = vmatpush.msra.mxu0 0.0
        %1666 = vmatpush.msra.mxu0 0.0
        %1667 = vmatpush.msra.mxu0 0.0
        %1668 = vmatpush.msra.mxu0 %v1623
        %1669 = vmatpush.msra.mxu0 %v1621
        %1670 = vmatpush.msra.mxu0 %v1619
        %1671 = vmatpush.msra.mxu0 %v1617
        %1672 = vmatmul.f32.gmra.mxu0 %v1634
        %v1673 = vpop.f32.mrf.mxu0
        %v1674 = vadd.f32 %v1631, %v1673
        %1675 = vdwg.mxu0
        %v1676 = vxor.u32 %v1654, 2147483648
        %v1677 = vxor.u32 %v1674, 2147483648
        %v1678 = vmul.f32 %v1676, 1.442695
        %v1679 = vpow.pop %v1678
        %v1680 = vmul.f32 %v1677, 1.442695
        %v1681 = vpow.pop %v1680
        %v1682 = vadd.f32 %v1679, 1.0
        %v1683 = vadd.f32 %v1681, 1.0
        %v1684 = vrcp.pop %v1682
        %v1685 = vmul.f32 %v1682, %v1684
        %v1686 = vsub.f32 1.0, %v1685
        %v1687 = vmul.f32 %v1684, %v1686
        %v1688 = vadd.f32 %v1684, %v1687
        %vm1689 = vweird.f32 %v1682
        %vm1690 = vweird.f32 %v1684
        %vm1691 = vmor %vm1689, %vm1690
        %v1692 = vsel %vm1691, %v1684, %v1688
        %v1693 = vand.u32 2147483647, %v1682
        %vm1694 = vcmp.eq.f32.partialorder %v1693, 8.507059e+37
        %v1695 = vand.u32 %v1682, 2147483648
        %v1696 = vor.u32 1.1754944e-38, %v1695
        %v1697 = vsel %vm1694, %v1696, %v1692
        %v1698 = vmul.f32 1.0, %v1697
        %v1699 = vrcp.pop %v1683
        %v1700 = vmul.f32 %v1683, %v1699
        %v1701 = vsub.f32 1.0, %v1700
        %v1702 = vmul.f32 %v1699, %v1701
        %v1703 = vadd.f32 %v1699, %v1702
        %vm1704 = vweird.f32 %v1683
        %vm1705 = vweird.f32 %v1699
        %vm1706 = vmor %vm1704, %vm1705
        %v1707 = vsel %vm1706, %v1699, %v1703
        %v1708 = vand.u32 2147483647, %v1683
        %vm1709 = vcmp.eq.f32.partialorder %v1708, 8.507059e+37
        %v1710 = vand.u32 %v1683, 2147483648
        %v1711 = vor.u32 1.1754944e-38, %v1710
        %v1712 = vsel %vm1709, %v1711, %v1707
        %v1713 = vmul.f32 1.0, %v1712
        %1714 = vst [vmem:[#allocation1] ss:$2 sm:$0xff] %v1298
        %v1715 = vld.sshfl [vmem:[#allocation1] sm:$0xff pattern:$0x75316420]
        %v1716 = vld.sshfl [vmem:[#allocation1 + $0x8] sm:$0xff pattern:$0x75316420]
        %v1719 = vmul.f32 %v1698, %v1715
        %v1720 = vmul.f32 %v1713, %v1716
        %v1721 = vadd.f32 %v1719, %v1508
        %v1722 = vadd.f32 %v1720, %v1509
        %1723 = vst [vmem:[#allocation3] sm:$0xf] %v1721
        %1724 = vst [vmem:[#allocation3 + $0x8] sm:$0xf] %v1722
        %s1726 = scalar_lea.vmem [#allocation1], 1
        %1727 = vst [vmem:[%s1726] ss:$2 sm:$0xff] %v1511
        %v1728 = vld.sshfl [vmem:[#allocation1] sm:$0xff pattern:$0x75316420]
        %v1729 = vld.sshfl [vmem:[#allocation1 + $0x8] sm:$0xff pattern:$0x75316420]
        %1732 = vst [vmem:[#allocation3] sm:$0xf0] %v1728
        %1733 = vst [vmem:[#allocation3 + $0x8] sm:$0xf0] %v1729
        %v1734 = vld [vmem:[#allocation2 + $0x140] sm:$0xff]
        %v1735 = vld [vmem:[#allocation2 + $0x148] sm:$0xff]
        %v1736 = vld [vmem:[#allocation2 + $0x150] sm:$0xff]
        %v1737 = vld [vmem:[#allocation2 + $0x158] sm:$0xff]
        %v1738 = vld [vmem:[#allocation2 + $0x160] sm:$0xff]
        %v1739 = vld [vmem:[#allocation2 + $0x168] sm:$0xff]
        %v1740 = vld [vmem:[#allocation2 + $0x170] sm:$0xff]
        %v1741 = vld [vmem:[#allocation2 + $0x178] sm:$0xff]
        %s1742 = scalar_lea.vmem %s3, 160
        %v1743 = vld [vmem:[%s1742] sm:$0xff]
        %v1744 = vld [vmem:[%s1742 + $0x8] sm:$0xff]
        %v1745 = vld [vmem:[%s1742 + $0x10] sm:$0xff]
        %v1746 = vld [vmem:[%s1742 + $0x18] sm:$0xff]
        %v1747 = vld [vmem:[#allocation3] sm:$0xff]
        %v1748 = vld [vmem:[#allocation3 + $0x8] sm:$0xff]
        %v1750 = vsel %vm898, %v1743, 0
        %v1753 = vsel %vm898, %v1744, 0
        %v1756 = vsel %vm898, %v1745, 0
        %v1759 = vsel %vm898, %v1746, 0
        %1761 = vmatpush.msra.mxu0 0.0
        %1762 = vmatpush.msra.mxu0 0.0
        %1763 = vmatpush.msra.mxu0 0.0
        %1764 = vmatpush.msra.mxu0 0.0
        %1765 = vmatpush.msra.mxu0 0.0
        %1766 = vmatpush.msra.mxu0 0.0
        %1767 = vmatpush.msra.mxu0 0.0
        %1768 = vmatpush.msra.mxu0 0.0
        %1769 = vmatpush.msra.mxu0 0.0
        %1770 = vmatpush.msra.mxu0 0.0
        %1771 = vmatpush.msra.mxu0 0.0
        %1772 = vmatpush.msra.mxu0 0.0
        %1773 = vmatpush.msra.mxu0 0.0
        %1774 = vmatpush.msra.mxu0 0.0
        %1775 = vmatpush.msra.mxu0 0.0
        %1776 = vmatpush.msra.mxu0 %v1747
        %1777 = vmatmul.f32.gmra.mxu0 %v1750
        %v1778 = vpop.f32.mrf.mxu0
        %v1779 = vadd.f32 0.0, %v1778
        %1780 = vmatmul.f32.gmra.mxu0 %v1753
        %v1781 = vpop.f32.mrf.mxu0
        %v1782 = vadd.f32 0.0, %v1781
        %1783 = vmatmul.f32.gmra.mxu0 %v1756
        %v1784 = vpop.f32.mrf.mxu0
        %v1785 = vadd.f32 0.0, %v1784
        %1786 = vmatmul.f32.gmra.mxu0 %v1759
        %v1787 = vpop.f32.mrf.mxu0
        %v1788 = vadd.f32 0.0, %v1787
        %1789 = vdwg.mxu0
        %1790 = vmatpush.msra.mxu0 0.0
        %1791 = vmatpush.msra.mxu0 0.0
        %1792 = vmatpush.msra.mxu0 0.0
        %1793 = vmatpush.msra.mxu0 0.0
        %1794 = vmatpush.msra.mxu0 0.0
        %1795 = vmatpush.msra.mxu0 0.0
        %1796 = vmatpush.msra.mxu0 0.0
        %1797 = vmatpush.msra.mxu0 0.0
        %1798 = vmatpush.msra.mxu0 0.0
        %1799 = vmatpush.msra.mxu0 0.0
        %1800 = vmatpush.msra.mxu0 0.0
        %1801 = vmatpush.msra.mxu0 0.0
        %1802 = vmatpush.msra.mxu0 0.0
        %1803 = vmatpush.msra.mxu0 0.0
        %1804 = vmatpush.msra.mxu0 0.0
        %1805 = vmatpush.msra.mxu0 %v1748
        %1806 = vmatmul.f32.gmra.mxu0 %v1750
        %v1807 = vpop.f32.mrf.mxu0
        %v1808 = vadd.f32 0.0, %v1807
        %1809 = vmatmul.f32.gmra.mxu0 %v1753
        %v1810 = vpop.f32.mrf.mxu0
        %v1811 = vadd.f32 0.0, %v1810
        %1812 = vmatmul.f32.gmra.mxu0 %v1756
        %v1813 = vpop.f32.mrf.mxu0
        %v1814 = vadd.f32 0.0, %v1813
        %1815 = vmatmul.f32.gmra.mxu0 %v1759
        %v1816 = vpop.f32.mrf.mxu0
        %v1817 = vadd.f32 0.0, %v1816
        %1818 = vdwg.mxu0
        %v1819 = vadd.f32 %v1734, %v1779
        %v1820 = vadd.f32 %v1735, %v1808
        %v1821 = vadd.f32 %v1736, %v1782
        %v1822 = vadd.f32 %v1737, %v1811
        %v1823 = vadd.f32 %v1738, %v1785
        %v1824 = vadd.f32 %v1739, %v1814
        %v1825 = vadd.f32 %v1740, %v1788
        %v1826 = vadd.f32 %v1741, %v1817
        %v1827 = vmax.f32 %v1819, 0.0
        %v1828 = vmax.f32 %v1820, 0.0
        %v1829 = vmax.f32 %v1821, 0.0
        %v1830 = vmax.f32 %v1822, 0.0
        %v1831 = vmax.f32 %v1823, 0.0
        %v1832 = vmax.f32 %v1824, 0.0
        %v1833 = vmax.f32 %v1825, 0.0
        %v1834 = vmax.f32 %v1826, 0.0
        %s1835 = scalar_lea.vmem %s4, 20
        %v1836 = vld [vmem:[%s1835] sm:$0xf]
        %s1837 = scalar_lea.vmem %s5, 20
        %v1838 = vld [vmem:[%s1837] sm:$0xf]
        %1840 = vset.pattern.permute.xlu0 0
        %1841 = vperm.xlu0 %1840, %v1838
        %v1842 = vpop.permute.xlu0 %1841
        %v1845 = vsel %vm781, %v1836, 0
        %1847 = vmatpush.msra.mxu0 0.0
        %1848 = vmatpush.msra.mxu0 0.0
        %1849 = vmatpush.msra.mxu0 0.0
        %1850 = vmatpush.msra.mxu0 0.0
        %1851 = vmatpush.msra.mxu0 0.0
        %1852 = vmatpush.msra.mxu0 0.0
        %1853 = vmatpush.msra.mxu0 0.0
        %1854 = vmatpush.msra.mxu0 0.0
        %1855 = vmatpush.msra.mxu0 0.0
        %1856 = vmatpush.msra.mxu0 0.0
        %1857 = vmatpush.msra.mxu0 0.0
        %1858 = vmatpush.msra.mxu0 0.0
        %1859 = vmatpush.msra.mxu0 %v1833
        %1860 = vmatpush.msra.mxu0 %v1831
        %1861 = vmatpush.msra.mxu0 %v1829
        %1862 = vmatpush.msra.mxu0 %v1827
        %1863 = vmatmul.f32.gmra.mxu0 %v1845
        %v1864 = vpop.f32.mrf.mxu0
        %v1865 = vadd.f32 %v1842, %v1864
        %1866 = vdwg.mxu0
        %1867 = vmatpush.msra.mxu0 0.0
        %1868 = vmatpush.msra.mxu0 0.0
        %1869 = vmatpush.msra.mxu0 0.0
        %1870 = vmatpush.msra.mxu0 0.0
        %1871 = vmatpush.msra.mxu0 0.0
        %1872 = vmatpush.msra.mxu0 0.0
        %1873 = vmatpush.msra.mxu0 0.0
        %1874 = vmatpush.msra.mxu0 0.0
        %1875 = vmatpush.msra.mxu0 0.0
        %1876 = vmatpush.msra.mxu0 0.0
        %1877 = vmatpush.msra.mxu0 0.0
        %1878 = vmatpush.msra.mxu0 0.0
        %1879 = vmatpush.msra.mxu0 %v1834
        %1880 = vmatpush.msra.mxu0 %v1832
        %1881 = vmatpush.msra.mxu0 %v1830
        %1882 = vmatpush.msra.mxu0 %v1828
        %1883 = vmatmul.f32.gmra.mxu0 %v1845
        %v1884 = vpop.f32.mrf.mxu0
        %v1885 = vadd.f32 %v1842, %v1884
        %1886 = vdwg.mxu0
        %v1887 = vxor.u32 %v1865, 2147483648
        %v1888 = vxor.u32 %v1885, 2147483648
        %v1889 = vmul.f32 %v1887, 1.442695
        %v1890 = vpow.pop %v1889
        %v1891 = vmul.f32 %v1888, 1.442695
        %v1892 = vpow.pop %v1891
        %v1893 = vadd.f32 %v1890, 1.0
        %v1894 = vadd.f32 %v1892, 1.0
        %v1895 = vrcp.pop %v1893
        %v1896 = vmul.f32 %v1893, %v1895
        %v1897 = vsub.f32 1.0, %v1896
        %v1898 = vmul.f32 %v1895, %v1897
        %v1899 = vadd.f32 %v1895, %v1898
        %vm1900 = vweird.f32 %v1893
        %vm1901 = vweird.f32 %v1895
        %vm1902 = vmor %vm1900, %vm1901
        %v1903 = vsel %vm1902, %v1895, %v1899
        %v1904 = vand.u32 2147483647, %v1893
        %vm1905 = vcmp.eq.f32.partialorder %v1904, 8.507059e+37
        %v1906 = vand.u32 %v1893, 2147483648
        %v1907 = vor.u32 1.1754944e-38, %v1906
        %v1908 = vsel %vm1905, %v1907, %v1903
        %v1909 = vmul.f32 1.0, %v1908
        %v1910 = vrcp.pop %v1894
        %v1911 = vmul.f32 %v1894, %v1910
        %v1912 = vsub.f32 1.0, %v1911
        %v1913 = vmul.f32 %v1910, %v1912
        %v1914 = vadd.f32 %v1910, %v1913
        %vm1915 = vweird.f32 %v1894
        %vm1916 = vweird.f32 %v1910
        %vm1917 = vmor %vm1915, %vm1916
        %v1918 = vsel %vm1917, %v1910, %v1914
        %v1919 = vand.u32 2147483647, %v1894
        %vm1920 = vcmp.eq.f32.partialorder %v1919, 8.507059e+37
        %v1921 = vand.u32 %v1894, 2147483648
        %v1922 = vor.u32 1.1754944e-38, %v1921
        %v1923 = vsel %vm1920, %v1922, %v1918
        %v1924 = vmul.f32 1.0, %v1923
        %1925 = vst [vmem:[#allocation1] ss:$2 sm:$0xff] %v1511
        %v1926 = vld.sshfl [vmem:[#allocation1] sm:$0xff pattern:$0x75316420]
        %v1927 = vld.sshfl [vmem:[#allocation1 + $0x8] sm:$0xff pattern:$0x75316420]
        %v1930 = vmul.f32 %v1909, %v1926
        %v1931 = vmul.f32 %v1924, %v1927
        %v1932 = vadd.f32 %v1930, %v1721
        %v1933 = vadd.f32 %v1931, %v1722
        %v1936 = vrot.slane %v1933, 4
        %v1937 = vsel %vm527, %v1932, %v1936
        %1939 = vst [vmem:[%s269] sm:$0xff] %v1937
        %s1940 = sand.u32 %s175, 1
        %s1941 = scalar_lea.sflag [#allocation5], %s1940
        %s1942 = sand.u32 %s175, 1
        %s1943 = smul.addr %s1942, 8
        %s1944 = scalar_lea.vmem [#allocation4], %s1943
        // Predicated region
        $region45: #{tpu_custom_call.1} parent=43 // pred_check
          %p1945 = pneg %p185
        $region46: #{tpu_custom_call.1} parent=43 // pred_check_branch
          %1947 = sbr.rel (%p1945) target = $region48
        $region47: #{tpu_custom_call.1} parent=43 // pred_region
          %s1948 = smul.u32 2, %s25
          %1950 = vsyncadd %s1941, 0
          %s1951 = smul.addr %s24, 2
          %s1952 = sadd.s32 %s1948, %s1951
          %s1953 = smul.addr %s1952, 4
          %s1954 = scalar_lea.hbm %s6, %s1953
          %s1956 = sshll.u32 %s1944, 4
          %s1957 = int_to_ptr.vmem [resolvable:$true] %s1956
          %s1958 = sshll.u32 %s1954, 4
          %s1959 = int_to_ptr.hbm [resolvable:$true] %s1958
          %1961 = dma.vmem_to_hbm [thread:$0]  %s1957, 128, %s1959, %s1941
        $region48: #{tpu_custom_call.1} parent=43 // pred_fallthru
          _
      $region44: #{tpu_custom_call.1} parent=5 // pred_fallthru
        _
      %p1962 = scmp.le.s32.totalorder 2, %s15
      // Predicated region
      $region49: #{tpu_custom_call.1} parent=5 // pred_check
        %p1963 = pneg %p1962
      $region50: #{tpu_custom_call.1} parent=5 // pred_check_branch
        %1965 = sbr.rel (%p1963) target = $region52
      $region51: #{tpu_custom_call.1} parent=5 // pred_region
        %s1966 = ssub.s32 %s15, 2
        // Predicated region
        $region53: #{tpu_custom_call.1} parent=51 // pred_check
          %p1967 = pneg %p191
        $region54: #{tpu_custom_call.1} parent=51 // pred_check_branch
          %1969 = sbr.rel (%p1967) target = $region56
        $region55: #{tpu_custom_call.1} parent=51 // pred_region
          %s1970 = sand.u32 %s176, 1
          %s1971 = scalar_lea.sflag [#allocation5], %s1970
          %s1972 = sand.u32 %s176, 1
          %s1973 = smul.addr %s1972, 8
          %s1974 = scalar_lea.vmem [#allocation4], %s1973
          %1976 = dma.done %s1971, 128
        $region56: #{tpu_custom_call.1} parent=51 // pred_fallthru
          _
      $region52: #{tpu_custom_call.1} parent=5 // pred_fallthru
        _
    $region6: #{tpu_custom_call.1} parent=1 // loop_footer
      %s19 = sadd.s32 1, %s15
    $region7: #{tpu_custom_call.1} parent=1 // loop_footer_branch
      %14 = sbr.rel target = $region3
    $region8: #{tpu_custom_call.1} parent=1 // loop_exit
      _
    %1977 = vsyncpa [#allocation5], 1
    %s1978 = scalar_lea.sflag [#allocation5], 1
    %1979 = vsyncpa %s1978, 1

</llo_original>
